<compile_context>
chip_gen: v5e
topology: v5e:2x2
jax: 0.10.0
libtpu: 0.0.40
codegen_flags: <defaults>
</compile_context>

<pallas_src>
import functools

import jax
import jax.numpy as jnp
from jax.experimental import pallas as pl
from jax.experimental.pallas import tpu as pltpu


# ---------------------------------------------------------------------------
# Kernels
# ---------------------------------------------------------------------------

def _pfn_stats_kernel(x_ref, w_ref, sum_ref, sumsq_ref):
    """Accumulate per-channel sum(y) and sum(y*y) over all pillar tiles."""
    @pl.when(pl.program_id(0) == 0)
    def _():
        sum_ref[...] = jnp.zeros_like(sum_ref)
        sumsq_ref[...] = jnp.zeros_like(sumsq_ref)

    tn, p, cin = x_ref.shape
    x = x_ref[...].reshape(tn * p, cin)          # free: minor dim unchanged
    y = jnp.dot(x, w_ref[...], preferred_element_type=jnp.float32)
    sum_ref[...] += jnp.sum(y, axis=0, keepdims=True)
    sumsq_ref[...] += jnp.sum(y * y, axis=0, keepdims=True)


def _pfn_main_kernel(x_ref, w_ref, scale_ref, shift_ref, out_ref, *,
                     last_vfe, apply_scale):
    """Per-tile: linear -> affine (folded BN or bias) -> relu -> max/concat."""
    tn, p, cin = x_ref.shape
    cout = w_ref.shape[1]

    x = x_ref[...].reshape(tn * p, cin)
    y = jnp.dot(x, w_ref[...], preferred_element_type=jnp.float32)
    if apply_scale:                               # static: compiled out if False
        y = y * scale_ref[...] + shift_ref[...]
    else:
        y = y + shift_ref[...]                    # plain linear bias
    y = jnp.maximum(y, 0.0)

    y3 = y.reshape(tn, p, cout)
    y_max = jnp.max(y3, axis=1, keepdims=True)    # (tn, 1, cout)

    if last_vfe:
        out_ref[...] = y_max.astype(out_ref.dtype)
    else:
        out_ref[:, :, :cout] = y3.astype(out_ref.dtype)
        out_ref[:, :, cout:] = jnp.broadcast_to(
            y_max, (tn, p, cout)).astype(out_ref.dtype)


# ---------------------------------------------------------------------------
# Wrapper
# ---------------------------------------------------------------------------

def pfn_layer(inputs, weight, gamma, beta, *,
              use_norm=True, last_vfe=False, eps=1e-3,
              block_pillars=256, compute_dtype=jnp.float32, out_dtype=None):
    """Fused PFNLayer forward on TPU.

    inputs: (N, P, Cin) float32
    weight: (Cin, Cout) float32   (transposed nn.Linear weight)
    gamma:  (Cout,) BN weight (ignored if not use_norm)
    beta:   (Cout,) BN bias, or the linear bias when use_norm=False
    compute_dtype: dtype of the matmul operands (f32 or bf16); accumulation,
                   BN statistics and all elementwise math stay in f32.
    out_dtype: output dtype (default float32, matching the PyTorch module).
    """
    n, p, cin = inputs.shape
    cout = weight.shape[1]
    out_dtype = jnp.float32 if out_dtype is None else out_dtype

    x = inputs.astype(compute_dtype)
    w = weight.astype(compute_dtype)

    tn = min(block_pillars, n)
    num_blocks = -(-n // tn)
    n_pad = num_blocks * tn
    if n_pad != n:
        # Zero pillars contribute exactly 0 to the BN sums (no linear bias in
        # the use_norm path) and their outputs are sliced away below.
        x = jnp.pad(x, ((0, n_pad - n), (0, 0), (0, 0)))

    x_spec = pl.BlockSpec((tn, p, cin), lambda i: (i, 0, 0))
    w_spec = pl.BlockSpec((cin, cout), lambda i: (0, 0))
    vec_spec = pl.BlockSpec((1, cout), lambda i: (0, 0))

    vmem_limit = 32 * 1024 * 1024

    if use_norm:
        # Pass 1: global per-channel statistics of y = x @ w.
        sum_y, sumsq_y = pl.pallas_call(
            _pfn_stats_kernel,
            out_shape=(jax.ShapeDtypeStruct((1, cout), jnp.float32),
                       jax.ShapeDtypeStruct((1, cout), jnp.float32)),
            grid=(num_blocks,),
            in_specs=[x_spec, w_spec],
            out_specs=(vec_spec, vec_spec),
            compiler_params=pltpu.CompilerParams(
                dimension_semantics=("arbitrary",),
                vmem_limit_bytes=vmem_limit),
        )(x, w)

        count = float(n * p)                       # real rows only
        mean = sum_y[0] / count                    # (Cout,)
        var = jnp.maximum(sumsq_y[0] / count - mean * mean, 0.0)
        inv_std = jax.lax.rsqrt(var + eps)
        scale = gamma.astype(jnp.float32) * inv_std
        shift = beta.astype(jnp.float32) - mean * scale
    else:
        scale = jnp.ones((cout,), jnp.float32)     # unused (compiled out)
        shift = beta.astype(jnp.float32)           # linear bias

    out_shape = (n_pad, 1, cout) if last_vfe else (n_pad, p, 2 * cout)
    out_block = (tn, 1, cout) if last_vfe else (tn, p, 2 * cout)

    out = pl.pallas_call(
        functools.partial(_pfn_main_kernel, last_vfe=last_vfe,
                          apply_scale=use_norm),
        out_shape=jax.ShapeDtypeStruct(out_shape, out_dtype),
        grid=(num_blocks,),
        in_specs=[x_spec, w_spec, vec_spec, vec_spec],
        out_specs=pl.BlockSpec(out_block, lambda i: (i, 0, 0)),
        compiler_params=pltpu.CompilerParams(
            dimension_semantics=("parallel",),
            vmem_limit_bytes=vmem_limit),
    )(x, w, scale.reshape(1, cout), shift.reshape(1, cout))

    if n_pad != n:
        out = out[:n]
    return out


# ---------------------------------------------------------------------------
# Reference + demo
# ---------------------------------------------------------------------------

def _reference(inputs, weight, gamma, beta, *, use_norm, last_vfe,
               compute_dtype=jnp.float32, eps=1e-3):
    n, p, cin = inputs.shape
    cout = weight.shape[1]
    x2 = inputs.astype(compute_dtype).reshape(n * p, cin)
    y = jnp.dot(x2, weight.astype(compute_dtype),
                preferred_element_type=jnp.float32)
    if use_norm:
        mean = y.mean(axis=0, keepdims=True)
        var = ((y - mean) ** 2).mean(axis=0, keepdims=True)
        y = (y - mean) * jax.lax.rsqrt(var + eps) * gamma + beta
    else:
        y = y + beta
    y = jnp.maximum(y, 0.0).reshape(n, p, cout)
    y_max = y.max(axis=1, keepdims=True)
    if last_vfe:
        return y_max
    return jnp.concatenate([y, jnp.broadcast_to(y_max, (n, p, cout))], axis=-1)


if __name__ == "__main__":
    # PFNLayer(in_channels=10, out_channels=64, use_norm=True, last_layer=False)
    # -> internal out channels = 64 // 2 = 32, concat output = 64.
    N, P, Cin, out_channels = 100, 32, 10, 64
    Cout = out_channels // 2

    key = jax.random.PRNGKey(0)
    k1, k2, k3, k4, k5 = jax.random.split(key, 5)
    inputs = jax.random.normal(k1, (N, P, Cin), jnp.float32)
    weight = jax.random.normal(k2, (Cin, Cout), jnp.float32) * 0.1
    gamma = 1.0 + 0.1 * jax.random.normal(k3, (Cout,), jnp.float32)
    beta = 0.1 * jax.random.normal(k4, (Cout,), jnp.float32)
    bias = 0.1 * jax.random.normal(k5, (Cout,), jnp.float32)

    # 1) use_norm, non-last layer, f32 (block_pillars=32 -> 4-step grid + pad).
    out = pfn_layer(inputs, weight, gamma, beta,
                    use_norm=True, last_vfe=False, block_pillars=32,
                    compute_dtype=jnp.float32)
    out = jax.block_until_ready(out)
    ref = _reference(inputs, weight, gamma, beta, use_norm=True, last_vfe=False)
    assert out.shape == (N, P, 2 * Cout), out.shape
    err = float(jnp.abs(out - ref).max())
    assert jnp.allclose(out, ref, atol=2e-4, rtol=2e-4), err

    # 2) use_norm, non-last layer, bf16 matmul operands (f32 elsewhere).
    out_bf = pfn_layer(inputs, weight, gamma, beta,
                       use_norm=True, last_vfe=False, block_pillars=32,
                       compute_dtype=jnp.bfloat16)
    out_bf = jax.block_until_ready(out_bf)
    ref_bf = _reference(inputs, weight, gamma, beta, use_norm=True,
                        last_vfe=False, compute_dtype=jnp.bfloat16)
    err_bf = float(jnp.abs(out_bf - ref_bf).max())
    assert jnp.allclose(out_bf, ref_bf, atol=5e-3, rtol=5e-3), err_bf

    # 3) use_norm, last layer (output = per-pillar max only).
    out_last = pfn_layer(inputs, weight, gamma, beta,
                         use_norm=True, last_vfe=True, block_pillars=32,
                         compute_dtype=jnp.float32)
    out_last = jax.block_until_ready(out_last)
    ref_last = _reference(inputs, weight, gamma, beta,
                          use_norm=True, last_vfe=True)
    assert out_last.shape == (N, 1, Cout), out_last.shape
    err_last = float(jnp.abs(out_last - ref_last).max())
    assert jnp.allclose(out_last, ref_last, atol=2e-4, rtol=2e-4), err_last

    # 4) no norm (linear has a bias, passed via `beta`).
    out_nb = pfn_layer(inputs, weight, gamma, bias,
                       use_norm=False, last_vfe=False, block_pillars=32,
                       compute_dtype=jnp.float32)
    out_nb = jax.block_until_ready(out_nb)
    ref_nb = _reference(inputs, weight, gamma, bias,
                        use_norm=False, last_vfe=False)
    err_nb = float(jnp.abs(out_nb - ref_nb).max())
    assert jnp.allclose(out_nb, ref_nb, atol=1e-4, rtol=1e-4), err_nb

    # 5) bf16 compute + bf16 output (halves dominant HBM write; opt-in knob).
    out_b16 = pfn_layer(inputs, weight, gamma, beta,
                        use_norm=True, last_vfe=False, block_pillars=32,
                        compute_dtype=jnp.bfloat16, out_dtype=jnp.bfloat16)
    out_b16 = jax.block_until_ready(out_b16)
    assert out_b16.dtype == jnp.bfloat16
    err_b16 = float(jnp.abs(out_b16.astype(jnp.float32)
                            - ref_bf.astype(jnp.float32)).max())
    assert err_b16 < 5e-2, err_b16

    print("KERNEL_OK")
</pallas_src>

<mosaic_0001>
module attributes {stable_mosaic.version = 11 : i64} {
  func.func @_pfn_stats_kernel(%arg0: i32, %arg1: memref<32x32x10xf32, #tpu.memory_space<vmem>>, %arg2: memref<10x32xf32, #tpu.memory_space<vmem>>, %arg3: memref<1x32xf32, #tpu.memory_space<vmem>>, %arg4: memref<1x32xf32, #tpu.memory_space<vmem>>) attributes {dimension_semantics = [#tpu.dimension_semantics<arbitrary>], iteration_bounds = array<i64: 4>, scalar_prefetch = 0 : i64, scratch_operands = 0 : i64, tpu.core_type = #tpu.core_type<tc>, window_params = [{transform_indices = @transform_0, window_bounds = array<i64: 32, 32, 10>}, {pipeline_mode = #tpu.pipeline_mode<synchronous>, transform_indices = @transform_1, window_bounds = array<i64: 10, 32>}, {pipeline_mode = #tpu.pipeline_mode<synchronous>, transform_indices = @transform_2, window_bounds = array<i64: 1, 32>}, {pipeline_mode = #tpu.pipeline_mode<synchronous>, transform_indices = @transform_3, window_bounds = array<i64: 1, 32>}]} {
    %c0_i32 = arith.constant 0 : i32
    %0 = arith.cmpi eq, %arg0, %c0_i32 : i32
    %1 = arith.extui %0 : i1 to i32
    %c0_i32_0 = arith.constant 0 : i32
    %2 = arith.cmpi ne, %1, %c0_i32_0 : i32
    scf.if %2 {
      %cst_15 = arith.constant 0.000000e+00 : f32
      %18 = vector.broadcast %cst_15 : f32 to vector<1x32xf32>
      %c0_16 = arith.constant 0 : index
      %c0_17 = arith.constant 0 : index
      %19 = vector.load %arg3[%c0_16, %c0_17] : memref<1x32xf32, #tpu.memory_space<vmem>>, vector<1x32xf32>
      tpu.vector_store %arg3[%c0_16, %c0_17], %18 {strides = array<i32>} : memref<1x32xf32, #tpu.memory_space<vmem>>, vector<1x32xf32>,
      %cst_18 = arith.constant 0.000000e+00 : f32
      %20 = vector.broadcast %cst_18 : f32 to vector<1x32xf32>
      %c0_19 = arith.constant 0 : index
      %c0_20 = arith.constant 0 : index
      %21 = vector.load %arg4[%c0_19, %c0_20] : memref<1x32xf32, #tpu.memory_space<vmem>>, vector<1x32xf32>
      tpu.vector_store %arg4[%c0_19, %c0_20], %20 {strides = array<i32>} : memref<1x32xf32, #tpu.memory_space<vmem>>, vector<1x32xf32>,
    } else {
    }
    %c0 = arith.constant 0 : index
    %c0_1 = arith.constant 0 : index
    %c0_2 = arith.constant 0 : index
    %3 = vector.load %arg1[%c0, %c0_1, %c0_2] : memref<32x32x10xf32, #tpu.memory_space<vmem>>, vector<32x32x10xf32>
    %4 = vector.shape_cast %3 : vector<32x32x10xf32> to vector<1024x10xf32>
    %c0_3 = arith.constant 0 : index
    %c0_4 = arith.constant 0 : index
    %5 = vector.load %arg2[%c0_3, %c0_4] : memref<10x32xf32, #tpu.memory_space<vmem>>, vector<10x32xf32>
    %cst = arith.constant dense<0.000000e+00> : vector<1024x32xf32>
    %6 = tpu.matmul %4, %5, %cst {dimension_numbers = #tpu.dot_dimension_numbers<[1], [0], [0], [1], [0, 0, 1, 1], [], []>} : vector<1024x10xf32>, vector<10x32xf32>, vector<1024x32xf32> -> vector<1024x32xf32>
    %c0_5 = arith.constant 0 : index
    %c0_6 = arith.constant 0 : index
    %7 = vector.load %arg3[%c0_5, %c0_6] : memref<1x32xf32, #tpu.memory_space<vmem>>, vector<1x32xf32>
    %cst_7 = arith.constant dense<0.000000e+00> : vector<32xf32>
    %8 = vector.multi_reduction <add>, %6, %cst_7 [0] : vector<1024x32xf32> to vector<32xf32>
    %9 = vector.shape_cast %8 : vector<32xf32> to vector<1x32xf32>
    %10 = arith.addf %7, %9 : vector<1x32xf32>
    %c0_8 = arith.constant 0 : index
    %c0_9 = arith.constant 0 : index
    %11 = vector.load %arg3[%c0_8, %c0_9] : memref<1x32xf32, #tpu.memory_space<vmem>>, vector<1x32xf32>
    tpu.vector_store %arg3[%c0_8, %c0_9], %10 {strides = array<i32>} : memref<1x32xf32, #tpu.memory_space<vmem>>, vector<1x32xf32>,
    %c0_10 = arith.constant 0 : index
    %c0_11 = arith.constant 0 : index
    %12 = vector.load %arg4[%c0_10, %c0_11] : memref<1x32xf32, #tpu.memory_space<vmem>>, vector<1x32xf32>
    %13 = arith.mulf %6, %6 : vector<1024x32xf32>
    %cst_12 = arith.constant dense<0.000000e+00> : vector<32xf32>
    %14 = vector.multi_reduction <add>, %13, %cst_12 [0] : vector<1024x32xf32> to vector<32xf32>
    %15 = vector.shape_cast %14 : vector<32xf32> to vector<1x32xf32>
    %16 = arith.addf %12, %15 : vector<1x32xf32>
    %c0_13 = arith.constant 0 : index
    %c0_14 = arith.constant 0 : index
    %17 = vector.load %arg4[%c0_13, %c0_14] : memref<1x32xf32, #tpu.memory_space<vmem>>, vector<1x32xf32>
    tpu.vector_store %arg4[%c0_13, %c0_14], %16 {strides = array<i32>} : memref<1x32xf32, #tpu.memory_space<vmem>>, vector<1x32xf32>,
    return
  }
  func.func @transform_0(%arg0: i32) -> (i32, i32, i32) {
    %c0_i32 = arith.constant 0 : i32
    %c0_i32_0 = arith.constant 0 : i32
    %c0_i32_1 = arith.constant 0 : i32
    return %arg0, %c0_i32, %c0_i32_0 : i32, i32, i32
  }
  func.func @transform_1(%arg0: i32) -> (i32, i32) {
    %c0_i32 = arith.constant 0 : i32
    %c0_i32_0 = arith.constant 0 : i32
    %c0_i32_1 = arith.constant 0 : i32
    return %c0_i32, %c0_i32_0 : i32, i32
  }
  func.func @transform_2(%arg0: i32) -> (i32, i32) {
    %c0_i32 = arith.constant 0 : i32
    %c0_i32_0 = arith.constant 0 : i32
    %c0_i32_1 = arith.constant 0 : i32
    return %c0_i32, %c0_i32_0 : i32, i32
  }
  func.func @transform_3(%arg0: i32) -> (i32, i32) {
    %c0_i32 = arith.constant 0 : i32
    %c0_i32_0 = arith.constant 0 : i32
    %c0_i32_1 = arith.constant 0 : i32
    return %c0_i32, %c0_i32_0 : i32, i32
  }
}

</mosaic_0001>

<llo_original>
// kernel: tpu_custom_call.1
$region0: #{tpu_custom_call.1}
  #allocation0 [shape = 'u32[]', space=smem, size = 0x4, offset = 0x4, fixed_abs, tag = 'smem constant byte address 0x4 - core index']
  #allocation1 [shape = 'u32[72,128]{1,0:T(1,128)}', space=vmem, size = 0x9000, scoped, tag = 'internal scratch']
  %s0 = inlined_call_operand.vmem [shape: f32[128,32,10], index: 0, kind: input, shape index: {}]
  %s1 = inlined_call_operand.vmem [shape: f32[10,32], index: 1, kind: input, shape index: {}]
  %s2 = inlined_call_operand.hbm [shape: f32[1,32], index: 2, kind: output, shape index: {0}]
  %s3 = inlined_call_operand.hbm [shape: f32[1,32], index: 3, kind: output, shape index: {1}]
  %4 = xla_tuple %s2, %s3
  %s5 = sld [smem:[#allocation0]]
  $region53: #{tpu_custom_call.1} parent=0
    _
  %s7 = ssub.s32 1, %s5
  %s8 = scalar_select 0, %s7, %s5
  $region1: #{tpu_custom_call.1} parent=0
    #allocation2 [shape = 'u8[512]{0}', space=vmem, size = 0x400, scoped, tag = 'output window, operand 0, single buffered']
    #allocation3 [shape = 's32[2]{0}', space=sflag, size = 0x8, scoped, tag = 'scoped memory for tpu_custom_call.1']
    #allocation4 [shape = 'u8[512]{0}', space=vmem, size = 0x400, scoped, tag = 'output window, operand 1, single buffered']
    #allocation5 [shape = 's32[1]{0}', space=sflag, size = 0x4, scoped, tag = 'scoped memory for tpu_custom_call.1']
    %9 = vsyncpa [#allocation3], 0
    %10 = vsyncpa [#allocation5], 0
    loop: start=0, step=1, limit=6
    $region2: #{tpu_custom_call.1} parent=1 // loop_pre_header
      _
    $region3: #{tpu_custom_call.1} parent=1 // loop_header
      %s12 = sphi 0, %s16
      %p13 = scmp.ge.s32.totalorder %s12, 6
      %s22 = sphi 0, %s24
      %s25 = sphi 0, %s22
      %s26 = sphi 0, %s25
      %s42 = sphi 0, %s26
      %s46 = sphi 0, %s46
      %s48 = sphi 0, %s46
      %s49 = sphi 0, %s48
      %s63 = sphi 0, %s49
      %s67 = sphi 0, %s67
      %s69 = sphi 0, %s67
      %s70 = sphi 0, %s69
      %s84 = sphi 0, %s70
      %s88 = sphi 0, %s88
      %s90 = sphi 0, %s88
      %s91 = sphi 0, %s90
      %s105 = sphi 0, %s91
    $region4: #{tpu_custom_call.1} parent=1 // loop_header_branch
      %15 = sbr.rel (%p13) target = $region8
    $region5: #{tpu_custom_call.1} parent=1 // loop_body
      %s17 = ssub.s32 %s12, 1
      %s18 = ssub.s32 %s12, 2
      %s19 = sadd.s32 %s12, 1
      %s20 = ssub.s32 %s12, %s19
      %p21 = scmp.eq.s32.totalorder %s20, 0
      %s23 = sadd.s32 %s22, 1
      %s24 = scalar_select %p21, %s22, %s23
      %p27 = pneg %p21
      %p28 = scmp.eq.s32.totalorder %s12, 3
      %p29 = por %p27, %p28
      %p30 = scmp.ne.s32.totalorder %s22, %s25
      %p31 = scmp.eq.s32.totalorder %s12, 0
      %p32 = por %p30, %p31
      %p33 = scmp.ne.s32.totalorder %s22, %s25
      %p34 = scmp.eq.s32.totalorder %s17, 3
      %p35 = por %p33, %p34
      %p36 = scmp.ne.s32.totalorder %s25, %s26
      %p37 = scmp.eq.s32.totalorder %s17, 0
      %p38 = por %p36, %p37
      %p39 = scmp.ne.s32.totalorder %s25, %s26
      %p40 = scmp.eq.s32.totalorder %s18, 3
      %p41 = por %p39, %p40
      %p43 = scmp.ne.s32.totalorder %s26, %s42
      %p44 = scmp.eq.s32.totalorder %s18, 0
      %p45 = por %p43, %p44
      %s47 = sadd.s32 %s46, 1
      %p50 = scmp.eq.s32.totalorder %s12, 3
      %p51 = scmp.ne.s32.totalorder %s46, %s48
      %p52 = scmp.eq.s32.totalorder %s12, 0
      %p53 = por %p51, %p52
      %p54 = scmp.ne.s32.totalorder %s46, %s48
      %p55 = scmp.eq.s32.totalorder %s17, 3
      %p56 = por %p54, %p55
      %p57 = scmp.ne.s32.totalorder %s48, %s49
      %p58 = scmp.eq.s32.totalorder %s17, 0
      %p59 = por %p57, %p58
      %p60 = scmp.ne.s32.totalorder %s48, %s49
      %p61 = scmp.eq.s32.totalorder %s18, 3
      %p62 = por %p60, %p61
      %p64 = scmp.ne.s32.totalorder %s49, %s63
      %p65 = scmp.eq.s32.totalorder %s18, 0
      %p66 = por %p64, %p65
      %s68 = sadd.s32 %s67, 1
      %p71 = scmp.eq.s32.totalorder %s12, 3
      %p72 = scmp.ne.s32.totalorder %s67, %s69
      %p73 = scmp.eq.s32.totalorder %s12, 0
      %p74 = por %p72, %p73
      %p75 = scmp.ne.s32.totalorder %s67, %s69
      %p76 = scmp.eq.s32.totalorder %s17, 3
      %p77 = por %p75, %p76
      %p78 = scmp.ne.s32.totalorder %s69, %s70
      %p79 = scmp.eq.s32.totalorder %s17, 0
      %p80 = por %p78, %p79
      %p81 = scmp.ne.s32.totalorder %s69, %s70
      %p82 = scmp.eq.s32.totalorder %s18, 3
      %p83 = por %p81, %p82
      %p85 = scmp.ne.s32.totalorder %s70, %s84
      %p86 = scmp.eq.s32.totalorder %s18, 0
      %p87 = por %p85, %p86
      %s89 = sadd.s32 %s88, 1
      %p92 = scmp.eq.s32.totalorder %s12, 3
      %p93 = scmp.ne.s32.totalorder %s88, %s90
      %p94 = scmp.eq.s32.totalorder %s12, 0
      %p95 = por %p93, %p94
      %p96 = scmp.ne.s32.totalorder %s88, %s90
      %p97 = scmp.eq.s32.totalorder %s17, 3
      %p98 = por %p96, %p97
      %p99 = scmp.ne.s32.totalorder %s90, %s91
      %p100 = scmp.eq.s32.totalorder %s17, 0
      %p101 = por %p99, %p100
      %p102 = scmp.ne.s32.totalorder %s90, %s91
      %p103 = scmp.eq.s32.totalorder %s18, 3
      %p104 = por %p102, %p103
      %p106 = scmp.ne.s32.totalorder %s91, %s105
      %p107 = scmp.eq.s32.totalorder %s18, 0
      %p108 = por %p106, %p107
      %p109 = scmp.le.s32.totalorder 1, %s12
      %p110 = scmp.lt.s32.totalorder %s12, 5
      %p111 = pnand %p109, %p110
      %p112 = pneg %p111
      // Predicated region
      $region9: #{tpu_custom_call.1} parent=5 // pred_check
        _
      $region10: #{tpu_custom_call.1} parent=5 // pred_check_branch
        %114 = sbr.rel (%p111) target = $region12
      $region11: #{tpu_custom_call.1} parent=5 // pred_region
        %s115 = ssub.s32 %s12, 1
        // Predicated region
        $region13: #{tpu_custom_call.1} parent=11 // pred_check
          %p116 = pneg %p59
        $region14: #{tpu_custom_call.1} parent=11 // pred_check_branch
          %118 = sbr.rel (%p116) target = $region16
        $region15: #{tpu_custom_call.1} parent=11 // pred_region
          _
        $region16: #{tpu_custom_call.1} parent=11 // pred_fallthru
          _
      $region12: #{tpu_custom_call.1} parent=5 // pred_fallthru
        _
      %p119 = scmp.lt.s32.totalorder %s12, 4
      // Predicated region
      $region17: #{tpu_custom_call.1} parent=5 // pred_check
        %p120 = pneg %p119
      $region18: #{tpu_custom_call.1} parent=5 // pred_check_branch
        %122 = sbr.rel (%p120) target = $region20
      $region19: #{tpu_custom_call.1} parent=5 // pred_region
        // Predicated region
        $region21: #{tpu_custom_call.1} parent=19 // pred_check
          %p123 = pneg %p32
        $region22: #{tpu_custom_call.1} parent=19 // pred_check_branch
          %125 = sbr.rel (%p123) target = $region24
        $region23: #{tpu_custom_call.1} parent=19 // pred_region
          %s126 = smul.u32 32, %s12
          %p127 = scmp.lt.s32.totalorder %s126, 127
          %s128 = scalar_select %p127, %s126, 127
          %s129 = smul.addr %s128, 4
          %s130 = smul.addr %s129, 8
          %s131 = scalar_lea.vmem %s0, %s130
          %s132 = smul.u32 32, %s12
        $region24: #{tpu_custom_call.1} parent=19 // pred_fallthru
          _
      $region20: #{tpu_custom_call.1} parent=5 // pred_fallthru
        _
      %p133 = scmp.le.s32.totalorder 1, %s12
      %p134 = scmp.lt.s32.totalorder %s12, 5
      %p135 = pnand %p133, %p134
      %p136 = pneg %p135
      // Predicated region
      $region25: #{tpu_custom_call.1} parent=5 // pred_check
        _
      $region26: #{tpu_custom_call.1} parent=5 // pred_check_branch
        %138 = sbr.rel (%p135) target = $region28
      $region27: #{tpu_custom_call.1} parent=5 // pred_region
        %s139 = ssub.s32 %s12, 1
        %s140 = smul.u32 32, %s17
        %p141 = scmp.lt.s32.totalorder %s140, 127
        %s142 = scalar_select %p141, %s140, 127
        %s143 = smul.addr %s142, 4
        %s144 = smul.addr %s143, 8
        %s145 = scalar_lea.vmem %s0, %s144
        %p146 = pneg %p38
        %p147 = pneg %p35
        %p148 = pneg %p59
        %p149 = pneg %p56
        %p150 = pneg %p80
        %p151 = pneg %p77
        %p152 = pneg %p101
        %p153 = pneg %p98
        %s154 = smul.u32 32, %s17
        %p155 = scmp.lt.s32.totalorder %s154, 127
        %s156 = scalar_select %p155, %s154, 127
        %s157 = smul.addr %s156, 4
        %s158 = smul.addr %s157, 8
        %s159 = scalar_lea.vmem %s0, %s158
        %s160 = smul.u32 32, %s17
        %p161 = scmp.eq.s32.totalorder %s17, 0
        // Predicated region
        $region29: #{tpu_custom_call.1} parent=27 // pred_check
          %p162 = pneg %p161
        $region30: #{tpu_custom_call.1} parent=27 // pred_check_branch
          %164 = sbr.rel (%p162) target = $region32
        $region31: #{tpu_custom_call.1} parent=27 // pred_region
          %vm165 = vcmask 253952
          %166 = vst.msk [vmem:[#allocation2] sm:$0x1] %vm165, 0.0
          %167 = vst.msk [vmem:[#allocation4] sm:$0x1] %vm165, 0.0
        $region32: #{tpu_custom_call.1} parent=27 // pred_fallthru
          _
        %v168 = vld [vmem:[%s159] sm:$0xff]
        %v169 = vld [vmem:[%s159 + $0x8] sm:$0xff]
        %v170 = vld [vmem:[%s159 + $0x10] sm:$0xff]
        %v171 = vld [vmem:[%s159 + $0x18] sm:$0xff]
        %v172 = vld [vmem:[%s159 + $0x20] sm:$0xff]
        %v173 = vld [vmem:[%s159 + $0x28] sm:$0xff]
        %v174 = vld [vmem:[%s159 + $0x30] sm:$0xff]
        %v175 = vld [vmem:[%s159 + $0x38] sm:$0xff]
        %v176 = vld [vmem:[%s159 + $0x40] sm:$0xff]
        %v177 = vld [vmem:[%s159 + $0x48] sm:$0xff]
        %v178 = vld [vmem:[%s159 + $0x50] sm:$0xff]
        %v179 = vld [vmem:[%s159 + $0x58] sm:$0xff]
        %v180 = vld [vmem:[%s159 + $0x60] sm:$0xff]
        %v181 = vld [vmem:[%s159 + $0x68] sm:$0xff]
        %v182 = vld [vmem:[%s159 + $0x70] sm:$0xff]
        %v183 = vld [vmem:[%s159 + $0x78] sm:$0xff]
        %v184 = vld [vmem:[%s159 + $0x80] sm:$0xff]
        %v185 = vld [vmem:[%s159 + $0x88] sm:$0xff]
        %v186 = vld [vmem:[%s159 + $0x90] sm:$0xff]
        %v187 = vld [vmem:[%s159 + $0x98] sm:$0xff]
        %v188 = vld [vmem:[%s159 + $0xa0] sm:$0xff]
        %v189 = vld [vmem:[%s159 + $0xa8] sm:$0xff]
        %v190 = vld [vmem:[%s159 + $0xb0] sm:$0xff]
        %v191 = vld [vmem:[%s159 + $0xb8] sm:$0xff]
        %v192 = vld [vmem:[%s159 + $0xc0] sm:$0xff]
        %v193 = vld [vmem:[%s159 + $0xc8] sm:$0xff]
        %v194 = vld [vmem:[%s159 + $0xd0] sm:$0xff]
        %v195 = vld [vmem:[%s159 + $0xd8] sm:$0xff]
        %v196 = vld [vmem:[%s159 + $0xe0] sm:$0xff]
        %v197 = vld [vmem:[%s159 + $0xe8] sm:$0xff]
        %v198 = vld [vmem:[%s159 + $0xf0] sm:$0xff]
        %v199 = vld [vmem:[%s159 + $0xf8] sm:$0xff]
        %v200 = vld [vmem:[%s159 + $0x100] sm:$0xff]
        %v201 = vld [vmem:[%s159 + $0x108] sm:$0xff]
        %v202 = vld [vmem:[%s159 + $0x110] sm:$0xff]
        %v203 = vld [vmem:[%s159 + $0x118] sm:$0xff]
        %v204 = vld [vmem:[%s159 + $0x120] sm:$0xff]
        %v205 = vld [vmem:[%s159 + $0x128] sm:$0xff]
        %v206 = vld [vmem:[%s159 + $0x130] sm:$0xff]
        %v207 = vld [vmem:[%s159 + $0x138] sm:$0xff]
        %v208 = vld [vmem:[%s159 + $0x140] sm:$0xff]
        %v209 = vld [vmem:[%s159 + $0x148] sm:$0xff]
        %v210 = vld [vmem:[%s159 + $0x150] sm:$0xff]
        %v211 = vld [vmem:[%s159 + $0x158] sm:$0xff]
        %v212 = vld [vmem:[%s159 + $0x160] sm:$0xff]
        %v213 = vld [vmem:[%s159 + $0x168] sm:$0xff]
        %v214 = vld [vmem:[%s159 + $0x170] sm:$0xff]
        %v215 = vld [vmem:[%s159 + $0x178] sm:$0xff]
        %v216 = vld [vmem:[%s159 + $0x180] sm:$0xff]
        %v217 = vld [vmem:[%s159 + $0x188] sm:$0xff]
        %v218 = vld [vmem:[%s159 + $0x190] sm:$0xff]
        %v219 = vld [vmem:[%s159 + $0x198] sm:$0xff]
        %v220 = vld [vmem:[%s159 + $0x1a0] sm:$0xff]
        %v221 = vld [vmem:[%s159 + $0x1a8] sm:$0xff]
        %v222 = vld [vmem:[%s159 + $0x1b0] sm:$0xff]
        %v223 = vld [vmem:[%s159 + $0x1b8] sm:$0xff]
        %v224 = vld [vmem:[%s159 + $0x1c0] sm:$0xff]
        %v225 = vld [vmem:[%s159 + $0x1c8] sm:$0xff]
        %v226 = vld [vmem:[%s159 + $0x1d0] sm:$0xff]
        %v227 = vld [vmem:[%s159 + $0x1d8] sm:$0xff]
        %v228 = vld [vmem:[%s159 + $0x1e0] sm:$0xff]
        %v229 = vld [vmem:[%s159 + $0x1e8] sm:$0xff]
        %v230 = vld [vmem:[%s159 + $0x1f0] sm:$0xff]
        %v231 = vld [vmem:[%s159 + $0x1f8] sm:$0xff]
        %v232 = vld [vmem:[%s159 + $0x200] sm:$0xff]
        %v233 = vld [vmem:[%s159 + $0x208] sm:$0xff]
        %v234 = vld [vmem:[%s159 + $0x210] sm:$0xff]
        %v235 = vld [vmem:[%s159 + $0x218] sm:$0xff]
        %v236 = vld [vmem:[%s159 + $0x220] sm:$0xff]
        %v237 = vld [vmem:[%s159 + $0x228] sm:$0xff]
        %v238 = vld [vmem:[%s159 + $0x230] sm:$0xff]
        %v239 = vld [vmem:[%s159 + $0x238] sm:$0xff]
        %v240 = vld [vmem:[%s159 + $0x240] sm:$0xff]
        %v241 = vld [vmem:[%s159 + $0x248] sm:$0xff]
        %v242 = vld [vmem:[%s159 + $0x250] sm:$0xff]
        %v243 = vld [vmem:[%s159 + $0x258] sm:$0xff]
        %v244 = vld [vmem:[%s159 + $0x260] sm:$0xff]
        %v245 = vld [vmem:[%s159 + $0x268] sm:$0xff]
        %v246 = vld [vmem:[%s159 + $0x270] sm:$0xff]
        %v247 = vld [vmem:[%s159 + $0x278] sm:$0xff]
        %v248 = vld [vmem:[%s159 + $0x280] sm:$0xff]
        %v249 = vld [vmem:[%s159 + $0x288] sm:$0xff]
        %v250 = vld [vmem:[%s159 + $0x290] sm:$0xff]
        %v251 = vld [vmem:[%s159 + $0x298] sm:$0xff]
        %v252 = vld [vmem:[%s159 + $0x2a0] sm:$0xff]
        %v253 = vld [vmem:[%s159 + $0x2a8] sm:$0xff]
        %v254 = vld [vmem:[%s159 + $0x2b0] sm:$0xff]
        %v255 = vld [vmem:[%s159 + $0x2b8] sm:$0xff]
        %v256 = vld [vmem:[%s159 + $0x2c0] sm:$0xff]
        %v257 = vld [vmem:[%s159 + $0x2c8] sm:$0xff]
        %v258 = vld [vmem:[%s159 + $0x2d0] sm:$0xff]
        %v259 = vld [vmem:[%s159 + $0x2d8] sm:$0xff]
        %v260 = vld [vmem:[%s159 + $0x2e0] sm:$0xff]
        %v261 = vld [vmem:[%s159 + $0x2e8] sm:$0xff]
        %v262 = vld [vmem:[%s159 + $0x2f0] sm:$0xff]
        %v263 = vld [vmem:[%s159 + $0x2f8] sm:$0xff]
        %v264 = vld [vmem:[%s159 + $0x300] sm:$0xff]
        %v265 = vld [vmem:[%s159 + $0x308] sm:$0xff]
        %v266 = vld [vmem:[%s159 + $0x310] sm:$0xff]
        %v267 = vld [vmem:[%s159 + $0x318] sm:$0xff]
        %v268 = vld [vmem:[%s159 + $0x320] sm:$0xff]
        %v269 = vld [vmem:[%s159 + $0x328] sm:$0xff]
        %v270 = vld [vmem:[%s159 + $0x330] sm:$0xff]
        %v271 = vld [vmem:[%s159 + $0x338] sm:$0xff]
        %v272 = vld [vmem:[%s159 + $0x340] sm:$0xff]
        %v273 = vld [vmem:[%s159 + $0x348] sm:$0xff]
        %v274 = vld [vmem:[%s159 + $0x350] sm:$0xff]
        %v275 = vld [vmem:[%s159 + $0x358] sm:$0xff]
        %v276 = vld [vmem:[%s159 + $0x360] sm:$0xff]
        %v277 = vld [vmem:[%s159 + $0x368] sm:$0xff]
        %v278 = vld [vmem:[%s159 + $0x370] sm:$0xff]
        %v279 = vld [vmem:[%s159 + $0x378] sm:$0xff]
        %v280 = vld [vmem:[%s159 + $0x380] sm:$0xff]
        %v281 = vld [vmem:[%s159 + $0x388] sm:$0xff]
        %v282 = vld [vmem:[%s159 + $0x390] sm:$0xff]
        %v283 = vld [vmem:[%s159 + $0x398] sm:$0xff]
        %v284 = vld [vmem:[%s159 + $0x3a0] sm:$0xff]
        %v285 = vld [vmem:[%s159 + $0x3a8] sm:$0xff]
        %v286 = vld [vmem:[%s159 + $0x3b0] sm:$0xff]
        %v287 = vld [vmem:[%s159 + $0x3b8] sm:$0xff]
        %v288 = vld [vmem:[%s159 + $0x3c0] sm:$0xff]
        %v289 = vld [vmem:[%s159 + $0x3c8] sm:$0xff]
        %v290 = vld [vmem:[%s159 + $0x3d0] sm:$0xff]
        %v291 = vld [vmem:[%s159 + $0x3d8] sm:$0xff]
        %v292 = vld [vmem:[%s159 + $0x3e0] sm:$0xff]
        %v293 = vld [vmem:[%s159 + $0x3e8] sm:$0xff]
        %v294 = vld [vmem:[%s159 + $0x3f0] sm:$0xff]
        %v295 = vld [vmem:[%s159 + $0x3f8] sm:$0xff]
        %v296 = vld [vmem:[%s1] sm:$0xff]
        %v297 = vld [vmem:[%s1 + $0x8] sm:$0x3]
        %vm298 = vcmask 80896
        %v300 = vsel %vm298, %v168, 0
        %v303 = vsel %vm298, %v169, 0
        %v306 = vsel %vm298, %v170, 0
        %v309 = vsel %vm298, %v171, 0
        %v312 = vsel %vm298, %v172, 0
        %v315 = vsel %vm298, %v173, 0
        %v318 = vsel %vm298, %v174, 0
        %v321 = vsel %vm298, %v175, 0
        %v324 = vsel %vm298, %v176, 0
        %v327 = vsel %vm298, %v177, 0
        %v330 = vsel %vm298, %v178, 0
        %v333 = vsel %vm298, %v179, 0
        %v336 = vsel %vm298, %v180, 0
        %v339 = vsel %vm298, %v181, 0
        %v342 = vsel %vm298, %v182, 0
        %v345 = vsel %vm298, %v183, 0
        %v348 = vsel %vm298, %v184, 0
        %v351 = vsel %vm298, %v185, 0
        %v354 = vsel %vm298, %v186, 0
        %v357 = vsel %vm298, %v187, 0
        %v360 = vsel %vm298, %v188, 0
        %v363 = vsel %vm298, %v189, 0
        %v366 = vsel %vm298, %v190, 0
        %v369 = vsel %vm298, %v191, 0
        %v372 = vsel %vm298, %v192, 0
        %v375 = vsel %vm298, %v193, 0
        %v378 = vsel %vm298, %v194, 0
        %v381 = vsel %vm298, %v195, 0
        %v384 = vsel %vm298, %v196, 0
        %v387 = vsel %vm298, %v197, 0
        %v390 = vsel %vm298, %v198, 0
        %v393 = vsel %vm298, %v199, 0
        %v396 = vsel %vm298, %v200, 0
        %v399 = vsel %vm298, %v201, 0
        %v402 = vsel %vm298, %v202, 0
        %v405 = vsel %vm298, %v203, 0
        %v408 = vsel %vm298, %v204, 0
        %v411 = vsel %vm298, %v205, 0
        %v414 = vsel %vm298, %v206, 0
        %v417 = vsel %vm298, %v207, 0
        %v420 = vsel %vm298, %v208, 0
        %v423 = vsel %vm298, %v209, 0
        %v426 = vsel %vm298, %v210, 0
        %v429 = vsel %vm298, %v211, 0
        %v432 = vsel %vm298, %v212, 0
        %v435 = vsel %vm298, %v213, 0
        %v438 = vsel %vm298, %v214, 0
        %v441 = vsel %vm298, %v215, 0
        %v444 = vsel %vm298, %v216, 0
        %v447 = vsel %vm298, %v217, 0
        %v450 = vsel %vm298, %v218, 0
        %v453 = vsel %vm298, %v219, 0
        %v456 = vsel %vm298, %v220, 0
        %v459 = vsel %vm298, %v221, 0
        %v462 = vsel %vm298, %v222, 0
        %v465 = vsel %vm298, %v223, 0
        %v468 = vsel %vm298, %v224, 0
        %v471 = vsel %vm298, %v225, 0
        %v474 = vsel %vm298, %v226, 0
        %v477 = vsel %vm298, %v227, 0
        %v480 = vsel %vm298, %v228, 0
        %v483 = vsel %vm298, %v229, 0
        %v486 = vsel %vm298, %v230, 0
        %v489 = vsel %vm298, %v231, 0
        %v492 = vsel %vm298, %v232, 0
        %v495 = vsel %vm298, %v233, 0
        %v498 = vsel %vm298, %v234, 0
        %v501 = vsel %vm298, %v235, 0
        %v504 = vsel %vm298, %v236, 0
        %v507 = vsel %vm298, %v237, 0
        %v510 = vsel %vm298, %v238, 0
        %v513 = vsel %vm298, %v239, 0
        %v516 = vsel %vm298, %v240, 0
        %v519 = vsel %vm298, %v241, 0
        %v522 = vsel %vm298, %v242, 0
        %v525 = vsel %vm298, %v243, 0
        %v528 = vsel %vm298, %v244, 0
        %v531 = vsel %vm298, %v245, 0
        %v534 = vsel %vm298, %v246, 0
        %v537 = vsel %vm298, %v247, 0
        %v540 = vsel %vm298, %v248, 0
        %v543 = vsel %vm298, %v249, 0
        %v546 = vsel %vm298, %v250, 0
        %v549 = vsel %vm298, %v251, 0
        %v552 = vsel %vm298, %v252, 0
        %v555 = vsel %vm298, %v253, 0
        %v558 = vsel %vm298, %v254, 0
        %v561 = vsel %vm298, %v255, 0
        %v564 = vsel %vm298, %v256, 0
        %v567 = vsel %vm298, %v257, 0
        %v570 = vsel %vm298, %v258, 0
        %v573 = vsel %vm298, %v259, 0
        %v576 = vsel %vm298, %v260, 0
        %v579 = vsel %vm298, %v261, 0
        %v582 = vsel %vm298, %v262, 0
        %v585 = vsel %vm298, %v263, 0
        %v588 = vsel %vm298, %v264, 0
        %v591 = vsel %vm298, %v265, 0
        %v594 = vsel %vm298, %v266, 0
        %v597 = vsel %vm298, %v267, 0
        %v600 = vsel %vm298, %v268, 0
        %v603 = vsel %vm298, %v269, 0
        %v606 = vsel %vm298, %v270, 0
        %v609 = vsel %vm298, %v271, 0
        %v612 = vsel %vm298, %v272, 0
        %v615 = vsel %vm298, %v273, 0
        %v618 = vsel %vm298, %v274, 0
        %v621 = vsel %vm298, %v275, 0
        %v624 = vsel %vm298, %v276, 0
        %v627 = vsel %vm298, %v277, 0
        %v630 = vsel %vm298, %v278, 0
        %v633 = vsel %vm298, %v279, 0
        %v636 = vsel %vm298, %v280, 0
        %v639 = vsel %vm298, %v281, 0
        %v642 = vsel %vm298, %v282, 0
        %v645 = vsel %vm298, %v283, 0
        %v648 = vsel %vm298, %v284, 0
        %v651 = vsel %vm298, %v285, 0
        %v654 = vsel %vm298, %v286, 0
        %v657 = vsel %vm298, %v287, 0
        %v660 = vsel %vm298, %v288, 0
        %v663 = vsel %vm298, %v289, 0
        %v666 = vsel %vm298, %v290, 0
        %v669 = vsel %vm298, %v291, 0
        %v672 = vsel %vm298, %v292, 0
        %v675 = vsel %vm298, %v293, 0
        %v678 = vsel %vm298, %v294, 0
        %v681 = vsel %vm298, %v295, 0
        %vm683 = vcmask 1041408
        %v685 = vsel %vm683, %v297, 0
        %687 = vmatpush.msra.mxu0 0.0
        %688 = vmatpush.msra.mxu0 0.0
        %689 = vmatpush.msra.mxu0 0.0
        %690 = vmatpush.msra.mxu0 0.0
        %691 = vmatpush.msra.mxu0 0.0
        %692 = vmatpush.msra.mxu0 0.0
        %693 = vmatpush.msra.mxu0 0.0
        %694 = vmatpush.msra.mxu0 0.0
        %695 = vmatpush.msra.mxu0 0.0
        %696 = vmatpush.msra.mxu0 0.0
        %697 = vmatpush.msra.mxu0 0.0
        %698 = vmatpush.msra.mxu0 0.0
        %699 = vmatpush.msra.mxu0 0.0
        %700 = vmatpush.msra.mxu0 0.0
        %701 = vmatpush.msra.mxu0 %v685
        %702 = vmatpush.msra.mxu0 %v296
        %703 = vmatmul.f32.gmra.mxu0 %v300
        %v704 = vpop.f32.mrf.mxu0
        %v705 = vadd.f32 0.0, %v704
        %706 = vmatmul.f32.gmra.mxu0 %v303
        %v707 = vpop.f32.mrf.mxu0
        %v708 = vadd.f32 0.0, %v707
        %709 = vmatmul.f32.gmra.mxu0 %v306
        %v710 = vpop.f32.mrf.mxu0
        %v711 = vadd.f32 0.0, %v710
        %712 = vmatmul.f32.gmra.mxu0 %v309
        %v713 = vpop.f32.mrf.mxu0
        %v714 = vadd.f32 0.0, %v713
        %715 = vmatmul.f32.gmra.mxu0 %v312
        %v716 = vpop.f32.mrf.mxu0
        %v717 = vadd.f32 0.0, %v716
        %718 = vmatmul.f32.gmra.mxu0 %v315
        %v719 = vpop.f32.mrf.mxu0
        %v720 = vadd.f32 0.0, %v719
        %721 = vmatmul.f32.gmra.mxu0 %v318
        %v722 = vpop.f32.mrf.mxu0
        %v723 = vadd.f32 0.0, %v722
        %724 = vmatmul.f32.gmra.mxu0 %v321
        %v725 = vpop.f32.mrf.mxu0
        %v726 = vadd.f32 0.0, %v725
        %727 = vmatmul.f32.gmra.mxu0 %v324
        %v728 = vpop.f32.mrf.mxu0
        %v729 = vadd.f32 0.0, %v728
        %730 = vmatmul.f32.gmra.mxu0 %v327
        %v731 = vpop.f32.mrf.mxu0
        %v732 = vadd.f32 0.0, %v731
        %733 = vmatmul.f32.gmra.mxu0 %v330
        %v734 = vpop.f32.mrf.mxu0
        %v735 = vadd.f32 0.0, %v734
        %736 = vmatmul.f32.gmra.mxu0 %v333
        %v737 = vpop.f32.mrf.mxu0
        %v738 = vadd.f32 0.0, %v737
        %739 = vmatmul.f32.gmra.mxu0 %v336
        %v740 = vpop.f32.mrf.mxu0
        %v741 = vadd.f32 0.0, %v740
        %742 = vmatmul.f32.gmra.mxu0 %v339
        %v743 = vpop.f32.mrf.mxu0
        %v744 = vadd.f32 0.0, %v743
        %745 = vmatmul.f32.gmra.mxu0 %v342
        %v746 = vpop.f32.mrf.mxu0
        %v747 = vadd.f32 0.0, %v746
        %748 = vmatmul.f32.gmra.mxu0 %v345
        %v749 = vpop.f32.mrf.mxu0
        %v750 = vadd.f32 0.0, %v749
        %751 = vmatmul.f32.gmra.mxu0 %v348
        %v752 = vpop.f32.mrf.mxu0
        %v753 = vadd.f32 0.0, %v752
        %754 = vmatmul.f32.gmra.mxu0 %v351
        %v755 = vpop.f32.mrf.mxu0
        %v756 = vadd.f32 0.0, %v755
        %757 = vmatmul.f32.gmra.mxu0 %v354
        %v758 = vpop.f32.mrf.mxu0
        %v759 = vadd.f32 0.0, %v758
        %760 = vmatmul.f32.gmra.mxu0 %v357
        %v761 = vpop.f32.mrf.mxu0
        %v762 = vadd.f32 0.0, %v761
        %763 = vmatmul.f32.gmra.mxu0 %v360
        %v764 = vpop.f32.mrf.mxu0
        %v765 = vadd.f32 0.0, %v764
        %766 = vmatmul.f32.gmra.mxu0 %v363
        %v767 = vpop.f32.mrf.mxu0
        %v768 = vadd.f32 0.0, %v767
        %769 = vmatmul.f32.gmra.mxu0 %v366
        %v770 = vpop.f32.mrf.mxu0
        %v771 = vadd.f32 0.0, %v770
        %772 = vmatmul.f32.gmra.mxu0 %v369
        %v773 = vpop.f32.mrf.mxu0
        %v774 = vadd.f32 0.0, %v773
        %775 = vmatmul.f32.gmra.mxu0 %v372
        %v776 = vpop.f32.mrf.mxu0
        %v777 = vadd.f32 0.0, %v776
        %778 = vmatmul.f32.gmra.mxu0 %v375
        %v779 = vpop.f32.mrf.mxu0
        %v780 = vadd.f32 0.0, %v779
        %781 = vmatmul.f32.gmra.mxu0 %v378
        %v782 = vpop.f32.mrf.mxu0
        %v783 = vadd.f32 0.0, %v782
        %784 = vmatmul.f32.gmra.mxu0 %v381
        %v785 = vpop.f32.mrf.mxu0
        %v786 = vadd.f32 0.0, %v785
        %787 = vmatmul.f32.gmra.mxu0 %v384
        %v788 = vpop.f32.mrf.mxu0
        %v789 = vadd.f32 0.0, %v788
        %790 = vmatmul.f32.gmra.mxu0 %v387
        %v791 = vpop.f32.mrf.mxu0
        %v792 = vadd.f32 0.0, %v791
        %793 = vmatmul.f32.gmra.mxu0 %v390
        %v794 = vpop.f32.mrf.mxu0
        %v795 = vadd.f32 0.0, %v794
        %796 = vmatmul.f32.gmra.mxu0 %v393
        %v797 = vpop.f32.mrf.mxu0
        %v798 = vadd.f32 0.0, %v797
        %799 = vmatmul.f32.gmra.mxu0 %v396
        %v800 = vpop.f32.mrf.mxu0
        %v801 = vadd.f32 0.0, %v800
        %802 = vmatmul.f32.gmra.mxu0 %v399
        %v803 = vpop.f32.mrf.mxu0
        %v804 = vadd.f32 0.0, %v803
        %805 = vmatmul.f32.gmra.mxu0 %v402
        %v806 = vpop.f32.mrf.mxu0
        %v807 = vadd.f32 0.0, %v806
        %808 = vmatmul.f32.gmra.mxu0 %v405
        %v809 = vpop.f32.mrf.mxu0
        %v810 = vadd.f32 0.0, %v809
        %811 = vmatmul.f32.gmra.mxu0 %v408
        %v812 = vpop.f32.mrf.mxu0
        %v813 = vadd.f32 0.0, %v812
        %814 = vmatmul.f32.gmra.mxu0 %v411
        %v815 = vpop.f32.mrf.mxu0
        %v816 = vadd.f32 0.0, %v815
        %817 = vmatmul.f32.gmra.mxu0 %v414
        %v818 = vpop.f32.mrf.mxu0
        %v819 = vadd.f32 0.0, %v818
        %820 = vmatmul.f32.gmra.mxu0 %v417
        %v821 = vpop.f32.mrf.mxu0
        %v822 = vadd.f32 0.0, %v821
        %823 = vmatmul.f32.gmra.mxu0 %v420
        %v824 = vpop.f32.mrf.mxu0
        %v825 = vadd.f32 0.0, %v824
        %826 = vmatmul.f32.gmra.mxu0 %v423
        %v827 = vpop.f32.mrf.mxu0
        %v828 = vadd.f32 0.0, %v827
        %829 = vmatmul.f32.gmra.mxu0 %v426
        %v830 = vpop.f32.mrf.mxu0
        %v831 = vadd.f32 0.0, %v830
        %832 = vmatmul.f32.gmra.mxu0 %v429
        %v833 = vpop.f32.mrf.mxu0
        %v834 = vadd.f32 0.0, %v833
        %835 = vmatmul.f32.gmra.mxu0 %v432
        %v836 = vpop.f32.mrf.mxu0
        %v837 = vadd.f32 0.0, %v836
        %838 = vmatmul.f32.gmra.mxu0 %v435
        %v839 = vpop.f32.mrf.mxu0
        %v840 = vadd.f32 0.0, %v839
        %841 = vmatmul.f32.gmra.mxu0 %v438
        %v842 = vpop.f32.mrf.mxu0
        %v843 = vadd.f32 0.0, %v842
        %844 = vmatmul.f32.gmra.mxu0 %v441
        %v845 = vpop.f32.mrf.mxu0
        %v846 = vadd.f32 0.0, %v845
        %847 = vmatmul.f32.gmra.mxu0 %v444
        %v848 = vpop.f32.mrf.mxu0
        %v849 = vadd.f32 0.0, %v848
        %850 = vmatmul.f32.gmra.mxu0 %v447
        %v851 = vpop.f32.mrf.mxu0
        %v852 = vadd.f32 0.0, %v851
        %853 = vmatmul.f32.gmra.mxu0 %v450
        %v854 = vpop.f32.mrf.mxu0
        %v855 = vadd.f32 0.0, %v854
        %856 = vmatmul.f32.gmra.mxu0 %v453
        %v857 = vpop.f32.mrf.mxu0
        %v858 = vadd.f32 0.0, %v857
        %859 = vmatmul.f32.gmra.mxu0 %v456
        %v860 = vpop.f32.mrf.mxu0
        %v861 = vadd.f32 0.0, %v860
        %862 = vmatmul.f32.gmra.mxu0 %v459
        %v863 = vpop.f32.mrf.mxu0
        %v864 = vadd.f32 0.0, %v863
        %865 = vmatmul.f32.gmra.mxu0 %v462
        %v866 = vpop.f32.mrf.mxu0
        %v867 = vadd.f32 0.0, %v866
        %868 = vmatmul.f32.gmra.mxu0 %v465
        %v869 = vpop.f32.mrf.mxu0
        %v870 = vadd.f32 0.0, %v869
        %871 = vmatmul.f32.gmra.mxu0 %v468
        %v872 = vpop.f32.mrf.mxu0
        %v873 = vadd.f32 0.0, %v872
        %874 = vmatmul.f32.gmra.mxu0 %v471
        %v875 = vpop.f32.mrf.mxu0
        %v876 = vadd.f32 0.0, %v875
        %877 = vmatmul.f32.gmra.mxu0 %v474
        %v878 = vpop.f32.mrf.mxu0
        %v879 = vadd.f32 0.0, %v878
        %880 = vmatmul.f32.gmra.mxu0 %v477
        %v881 = vpop.f32.mrf.mxu0
        %v882 = vadd.f32 0.0, %v881
        %883 = vmatmul.f32.gmra.mxu0 %v480
        %v884 = vpop.f32.mrf.mxu0
        %v885 = vadd.f32 0.0, %v884
        %886 = vmatmul.f32.gmra.mxu0 %v483
        %v887 = vpop.f32.mrf.mxu0
        %v888 = vadd.f32 0.0, %v887
        %889 = vmatmul.f32.gmra.mxu0 %v486
        %v890 = vpop.f32.mrf.mxu0
        %v891 = vadd.f32 0.0, %v890
        %892 = vmatmul.f32.gmra.mxu0 %v489
        %v893 = vpop.f32.mrf.mxu0
        %v894 = vadd.f32 0.0, %v893
        %895 = vmatmul.f32.gmra.mxu0 %v492
        %v896 = vpop.f32.mrf.mxu0
        %v897 = vadd.f32 0.0, %v896
        %898 = vmatmul.f32.gmra.mxu0 %v495
        %v899 = vpop.f32.mrf.mxu0
        %v900 = vadd.f32 0.0, %v899
        %901 = vmatmul.f32.gmra.mxu0 %v498
        %v902 = vpop.f32.mrf.mxu0
        %v903 = vadd.f32 0.0, %v902
        %904 = vmatmul.f32.gmra.mxu0 %v501
        %v905 = vpop.f32.mrf.mxu0
        %v906 = vadd.f32 0.0, %v905
        %907 = vmatmul.f32.gmra.mxu0 %v504
        %v908 = vpop.f32.mrf.mxu0
        %v909 = vadd.f32 0.0, %v908
        %910 = vmatmul.f32.gmra.mxu0 %v507
        %v911 = vpop.f32.mrf.mxu0
        %v912 = vadd.f32 0.0, %v911
        %913 = vmatmul.f32.gmra.mxu0 %v510
        %v914 = vpop.f32.mrf.mxu0
        %v915 = vadd.f32 0.0, %v914
        %916 = vmatmul.f32.gmra.mxu0 %v513
        %v917 = vpop.f32.mrf.mxu0
        %v918 = vadd.f32 0.0, %v917
        %919 = vmatmul.f32.gmra.mxu0 %v516
        %v920 = vpop.f32.mrf.mxu0
        %v921 = vadd.f32 0.0, %v920
        %922 = vmatmul.f32.gmra.mxu0 %v519
        %v923 = vpop.f32.mrf.mxu0
        %v924 = vadd.f32 0.0, %v923
        %925 = vmatmul.f32.gmra.mxu0 %v522
        %v926 = vpop.f32.mrf.mxu0
        %v927 = vadd.f32 0.0, %v926
        %928 = vmatmul.f32.gmra.mxu0 %v525
        %v929 = vpop.f32.mrf.mxu0
        %v930 = vadd.f32 0.0, %v929
        %931 = vmatmul.f32.gmra.mxu0 %v528
        %v932 = vpop.f32.mrf.mxu0
        %v933 = vadd.f32 0.0, %v932
        %934 = vmatmul.f32.gmra.mxu0 %v531
        %v935 = vpop.f32.mrf.mxu0
        %v936 = vadd.f32 0.0, %v935
        %937 = vmatmul.f32.gmra.mxu0 %v534
        %v938 = vpop.f32.mrf.mxu0
        %v939 = vadd.f32 0.0, %v938
        %940 = vmatmul.f32.gmra.mxu0 %v537
        %v941 = vpop.f32.mrf.mxu0
        %v942 = vadd.f32 0.0, %v941
        %943 = vmatmul.f32.gmra.mxu0 %v540
        %v944 = vpop.f32.mrf.mxu0
        %v945 = vadd.f32 0.0, %v944
        %946 = vmatmul.f32.gmra.mxu0 %v543
        %v947 = vpop.f32.mrf.mxu0
        %v948 = vadd.f32 0.0, %v947
        %949 = vmatmul.f32.gmra.mxu0 %v546
        %v950 = vpop.f32.mrf.mxu0
        %v951 = vadd.f32 0.0, %v950
        %952 = vmatmul.f32.gmra.mxu0 %v549
        %v953 = vpop.f32.mrf.mxu0
        %v954 = vadd.f32 0.0, %v953
        %955 = vmatmul.f32.gmra.mxu0 %v552
        %v956 = vpop.f32.mrf.mxu0
        %v957 = vadd.f32 0.0, %v956
        %958 = vmatmul.f32.gmra.mxu0 %v555
        %v959 = vpop.f32.mrf.mxu0
        %v960 = vadd.f32 0.0, %v959
        %961 = vmatmul.f32.gmra.mxu0 %v558
        %v962 = vpop.f32.mrf.mxu0
        %v963 = vadd.f32 0.0, %v962
        %964 = vmatmul.f32.gmra.mxu0 %v561
        %v965 = vpop.f32.mrf.mxu0
        %v966 = vadd.f32 0.0, %v965
        %967 = vmatmul.f32.gmra.mxu0 %v564
        %v968 = vpop.f32.mrf.mxu0
        %v969 = vadd.f32 0.0, %v968
        %970 = vmatmul.f32.gmra.mxu0 %v567
        %v971 = vpop.f32.mrf.mxu0
        %v972 = vadd.f32 0.0, %v971
        %973 = vmatmul.f32.gmra.mxu0 %v570
        %v974 = vpop.f32.mrf.mxu0
        %v975 = vadd.f32 0.0, %v974
        %976 = vmatmul.f32.gmra.mxu0 %v573
        %v977 = vpop.f32.mrf.mxu0
        %v978 = vadd.f32 0.0, %v977
        %979 = vmatmul.f32.gmra.mxu0 %v576
        %v980 = vpop.f32.mrf.mxu0
        %v981 = vadd.f32 0.0, %v980
        %982 = vmatmul.f32.gmra.mxu0 %v579
        %v983 = vpop.f32.mrf.mxu0
        %v984 = vadd.f32 0.0, %v983
        %985 = vmatmul.f32.gmra.mxu0 %v582
        %v986 = vpop.f32.mrf.mxu0
        %v987 = vadd.f32 0.0, %v986
        %988 = vmatmul.f32.gmra.mxu0 %v585
        %v989 = vpop.f32.mrf.mxu0
        %v990 = vadd.f32 0.0, %v989
        %991 = vmatmul.f32.gmra.mxu0 %v588
        %v992 = vpop.f32.mrf.mxu0
        %v993 = vadd.f32 0.0, %v992
        %994 = vmatmul.f32.gmra.mxu0 %v591
        %v995 = vpop.f32.mrf.mxu0
        %v996 = vadd.f32 0.0, %v995
        %997 = vmatmul.f32.gmra.mxu0 %v594
        %v998 = vpop.f32.mrf.mxu0
        %v999 = vadd.f32 0.0, %v998
        %1000 = vmatmul.f32.gmra.mxu0 %v597
        %v1001 = vpop.f32.mrf.mxu0
        %v1002 = vadd.f32 0.0, %v1001
        %1003 = vmatmul.f32.gmra.mxu0 %v600
        %v1004 = vpop.f32.mrf.mxu0
        %v1005 = vadd.f32 0.0, %v1004
        %1006 = vmatmul.f32.gmra.mxu0 %v603
        %v1007 = vpop.f32.mrf.mxu0
        %v1008 = vadd.f32 0.0, %v1007
        %1009 = vmatmul.f32.gmra.mxu0 %v606
        %v1010 = vpop.f32.mrf.mxu0
        %v1011 = vadd.f32 0.0, %v1010
        %1012 = vmatmul.f32.gmra.mxu0 %v609
        %v1013 = vpop.f32.mrf.mxu0
        %v1014 = vadd.f32 0.0, %v1013
        %1015 = vmatmul.f32.gmra.mxu0 %v612
        %v1016 = vpop.f32.mrf.mxu0
        %v1017 = vadd.f32 0.0, %v1016
        %1018 = vmatmul.f32.gmra.mxu0 %v615
        %v1019 = vpop.f32.mrf.mxu0
        %v1020 = vadd.f32 0.0, %v1019
        %1021 = vmatmul.f32.gmra.mxu0 %v618
        %v1022 = vpop.f32.mrf.mxu0
        %v1023 = vadd.f32 0.0, %v1022
        %1024 = vmatmul.f32.gmra.mxu0 %v621
        %v1025 = vpop.f32.mrf.mxu0
        %v1026 = vadd.f32 0.0, %v1025
        %1027 = vmatmul.f32.gmra.mxu0 %v624
        %v1028 = vpop.f32.mrf.mxu0
        %v1029 = vadd.f32 0.0, %v1028
        %1030 = vmatmul.f32.gmra.mxu0 %v627
        %v1031 = vpop.f32.mrf.mxu0
        %v1032 = vadd.f32 0.0, %v1031
        %1033 = vmatmul.f32.gmra.mxu0 %v630
        %v1034 = vpop.f32.mrf.mxu0
        %v1035 = vadd.f32 0.0, %v1034
        %1036 = vmatmul.f32.gmra.mxu0 %v633
        %v1037 = vpop.f32.mrf.mxu0
        %v1038 = vadd.f32 0.0, %v1037
        %1039 = vmatmul.f32.gmra.mxu0 %v636
        %v1040 = vpop.f32.mrf.mxu0
        %v1041 = vadd.f32 0.0, %v1040
        %1042 = vmatmul.f32.gmra.mxu0 %v639
        %v1043 = vpop.f32.mrf.mxu0
        %v1044 = vadd.f32 0.0, %v1043
        %1045 = vmatmul.f32.gmra.mxu0 %v642
        %v1046 = vpop.f32.mrf.mxu0
        %v1047 = vadd.f32 0.0, %v1046
        %1048 = vmatmul.f32.gmra.mxu0 %v645
        %v1049 = vpop.f32.mrf.mxu0
        %v1050 = vadd.f32 0.0, %v1049
        %1051 = vmatmul.f32.gmra.mxu0 %v648
        %v1052 = vpop.f32.mrf.mxu0
        %v1053 = vadd.f32 0.0, %v1052
        %1054 = vmatmul.f32.gmra.mxu0 %v651
        %v1055 = vpop.f32.mrf.mxu0
        %v1056 = vadd.f32 0.0, %v1055
        %1057 = vmatmul.f32.gmra.mxu0 %v654
        %v1058 = vpop.f32.mrf.mxu0
        %v1059 = vadd.f32 0.0, %v1058
        %1060 = vmatmul.f32.gmra.mxu0 %v657
        %v1061 = vpop.f32.mrf.mxu0
        %v1062 = vadd.f32 0.0, %v1061
        %1063 = vmatmul.f32.gmra.mxu0 %v660
        %v1064 = vpop.f32.mrf.mxu0
        %v1065 = vadd.f32 0.0, %v1064
        %1066 = vmatmul.f32.gmra.mxu0 %v663
        %v1067 = vpop.f32.mrf.mxu0
        %v1068 = vadd.f32 0.0, %v1067
        %1069 = vmatmul.f32.gmra.mxu0 %v666
        %v1070 = vpop.f32.mrf.mxu0
        %v1071 = vadd.f32 0.0, %v1070
        %1072 = vmatmul.f32.gmra.mxu0 %v669
        %v1073 = vpop.f32.mrf.mxu0
        %v1074 = vadd.f32 0.0, %v1073
        %1075 = vmatmul.f32.gmra.mxu0 %v672
        %v1076 = vpop.f32.mrf.mxu0
        %v1077 = vadd.f32 0.0, %v1076
        %1078 = vmatmul.f32.gmra.mxu0 %v675
        %v1079 = vpop.f32.mrf.mxu0
        %v1080 = vadd.f32 0.0, %v1079
        %1081 = vmatmul.f32.gmra.mxu0 %v678
        %v1082 = vpop.f32.mrf.mxu0
        %v1083 = vadd.f32 0.0, %v1082
        %1084 = vmatmul.f32.gmra.mxu0 %v681
        %v1085 = vpop.f32.mrf.mxu0
        %v1086 = vadd.f32 0.0, %v1085
        %1087 = vdwg.mxu0
        %v1088 = vld [vmem:[#allocation2] sm:$0x1]
        %vm1089 = vcmask 261120
        %v1090 = vsel %vm1089, %v705, 0.0
        %v1091 = vsel %vm1089, %v708, 0.0
        %v1092 = vadd.f32 %v1090, %v1091
        %v1093 = vsel %vm1089, %v711, 0.0
        %v1094 = vadd.f32 %v1092, %v1093
        %v1095 = vsel %vm1089, %v714, 0.0
        %v1096 = vadd.f32 %v1094, %v1095
        %v1097 = vsel %vm1089, %v717, 0.0
        %v1098 = vadd.f32 %v1096, %v1097
        %v1099 = vsel %vm1089, %v720, 0.0
        %v1100 = vadd.f32 %v1098, %v1099
        %v1101 = vsel %vm1089, %v723, 0.0
        %v1102 = vadd.f32 %v1100, %v1101
        %v1103 = vsel %vm1089, %v726, 0.0
        %v1104 = vadd.f32 %v1102, %v1103
        %v1105 = vsel %vm1089, %v729, 0.0
        %v1106 = vadd.f32 %v1104, %v1105
        %v1107 = vsel %vm1089, %v732, 0.0
        %v1108 = vadd.f32 %v1106, %v1107
        %v1109 = vsel %vm1089, %v735, 0.0
        %v1110 = vadd.f32 %v1108, %v1109
        %v1111 = vsel %vm1089, %v738, 0.0
        %v1112 = vadd.f32 %v1110, %v1111
        %v1113 = vsel %vm1089, %v741, 0.0
        %v1114 = vadd.f32 %v1112, %v1113
        %v1115 = vsel %vm1089, %v744, 0.0
        %v1116 = vadd.f32 %v1114, %v1115
        %v1117 = vsel %vm1089, %v747, 0.0
        %v1118 = vadd.f32 %v1116, %v1117
        %v1119 = vsel %vm1089, %v750, 0.0
        %v1120 = vadd.f32 %v1118, %v1119
        %v1121 = vsel %vm1089, %v753, 0.0
        %v1122 = vadd.f32 %v1120, %v1121
        %v1123 = vsel %vm1089, %v756, 0.0
        %v1124 = vadd.f32 %v1122, %v1123
        %v1125 = vsel %vm1089, %v759, 0.0
        %v1126 = vadd.f32 %v1124, %v1125
        %v1127 = vsel %vm1089, %v762, 0.0
        %v1128 = vadd.f32 %v1126, %v1127
        %v1129 = vsel %vm1089, %v765, 0.0
        %v1130 = vadd.f32 %v1128, %v1129
        %v1131 = vsel %vm1089, %v768, 0.0
        %v1132 = vadd.f32 %v1130, %v1131
        %v1133 = vsel %vm1089, %v771, 0.0
        %v1134 = vadd.f32 %v1132, %v1133
        %v1135 = vsel %vm1089, %v774, 0.0
        %v1136 = vadd.f32 %v1134, %v1135
        %v1137 = vsel %vm1089, %v777, 0.0
        %v1138 = vadd.f32 %v1136, %v1137
        %v1139 = vsel %vm1089, %v780, 0.0
        %v1140 = vadd.f32 %v1138, %v1139
        %v1141 = vsel %vm1089, %v783, 0.0
        %v1142 = vadd.f32 %v1140, %v1141
        %v1143 = vsel %vm1089, %v786, 0.0
        %v1144 = vadd.f32 %v1142, %v1143
        %v1145 = vsel %vm1089, %v789, 0.0
        %v1146 = vadd.f32 %v1144, %v1145
        %v1147 = vsel %vm1089, %v792, 0.0
        %v1148 = vadd.f32 %v1146, %v1147
        %v1149 = vsel %vm1089, %v795, 0.0
        %v1150 = vadd.f32 %v1148, %v1149
        %v1151 = vsel %vm1089, %v798, 0.0
        %v1152 = vadd.f32 %v1150, %v1151
        %v1153 = vsel %vm1089, %v801, 0.0
        %v1154 = vadd.f32 %v1152, %v1153
        %v1155 = vsel %vm1089, %v804, 0.0
        %v1156 = vadd.f32 %v1154, %v1155
        %v1157 = vsel %vm1089, %v807, 0.0
        %v1158 = vadd.f32 %v1156, %v1157
        %v1159 = vsel %vm1089, %v810, 0.0
        %v1160 = vadd.f32 %v1158, %v1159
        %v1161 = vsel %vm1089, %v813, 0.0
        %v1162 = vadd.f32 %v1160, %v1161
        %v1163 = vsel %vm1089, %v816, 0.0
        %v1164 = vadd.f32 %v1162, %v1163
        %v1165 = vsel %vm1089, %v819, 0.0
        %v1166 = vadd.f32 %v1164, %v1165
        %v1167 = vsel %vm1089, %v822, 0.0
        %v1168 = vadd.f32 %v1166, %v1167
        %v1169 = vsel %vm1089, %v825, 0.0
        %v1170 = vadd.f32 %v1168, %v1169
        %v1171 = vsel %vm1089, %v828, 0.0
        %v1172 = vadd.f32 %v1170, %v1171
        %v1173 = vsel %vm1089, %v831, 0.0
        %v1174 = vadd.f32 %v1172, %v1173
        %v1175 = vsel %vm1089, %v834, 0.0
        %v1176 = vadd.f32 %v1174, %v1175
        %v1177 = vsel %vm1089, %v837, 0.0
        %v1178 = vadd.f32 %v1176, %v1177
        %v1179 = vsel %vm1089, %v840, 0.0
        %v1180 = vadd.f32 %v1178, %v1179
        %v1181 = vsel %vm1089, %v843, 0.0
        %v1182 = vadd.f32 %v1180, %v1181
        %v1183 = vsel %vm1089, %v846, 0.0
        %v1184 = vadd.f32 %v1182, %v1183
        %v1185 = vsel %vm1089, %v849, 0.0
        %v1186 = vadd.f32 %v1184, %v1185
        %v1187 = vsel %vm1089, %v852, 0.0
        %v1188 = vadd.f32 %v1186, %v1187
        %v1189 = vsel %vm1089, %v855, 0.0
        %v1190 = vadd.f32 %v1188, %v1189
        %v1191 = vsel %vm1089, %v858, 0.0
        %v1192 = vadd.f32 %v1190, %v1191
        %v1193 = vsel %vm1089, %v861, 0.0
        %v1194 = vadd.f32 %v1192, %v1193
        %v1195 = vsel %vm1089, %v864, 0.0
        %v1196 = vadd.f32 %v1194, %v1195
        %v1197 = vsel %vm1089, %v867, 0.0
        %v1198 = vadd.f32 %v1196, %v1197
        %v1199 = vsel %vm1089, %v870, 0.0
        %v1200 = vadd.f32 %v1198, %v1199
        %v1201 = vsel %vm1089, %v873, 0.0
        %v1202 = vadd.f32 %v1200, %v1201
        %v1203 = vsel %vm1089, %v876, 0.0
        %v1204 = vadd.f32 %v1202, %v1203
        %v1205 = vsel %vm1089, %v879, 0.0
        %v1206 = vadd.f32 %v1204, %v1205
        %v1207 = vsel %vm1089, %v882, 0.0
        %v1208 = vadd.f32 %v1206, %v1207
        %v1209 = vsel %vm1089, %v885, 0.0
        %v1210 = vadd.f32 %v1208, %v1209
        %v1211 = vsel %vm1089, %v888, 0.0
        %v1212 = vadd.f32 %v1210, %v1211
        %v1213 = vsel %vm1089, %v891, 0.0
        %v1214 = vadd.f32 %v1212, %v1213
        %v1215 = vsel %vm1089, %v894, 0.0
        %v1216 = vadd.f32 %v1214, %v1215
        %v1217 = vsel %vm1089, %v897, 0.0
        %v1218 = vadd.f32 %v1216, %v1217
        %v1219 = vsel %vm1089, %v900, 0.0
        %v1220 = vadd.f32 %v1218, %v1219
        %v1221 = vsel %vm1089, %v903, 0.0
        %v1222 = vadd.f32 %v1220, %v1221
        %v1223 = vsel %vm1089, %v906, 0.0
        %v1224 = vadd.f32 %v1222, %v1223
        %v1225 = vsel %vm1089, %v909, 0.0
        %v1226 = vadd.f32 %v1224, %v1225
        %v1227 = vsel %vm1089, %v912, 0.0
        %v1228 = vadd.f32 %v1226, %v1227
        %v1229 = vsel %vm1089, %v915, 0.0
        %v1230 = vadd.f32 %v1228, %v1229
        %v1231 = vsel %vm1089, %v918, 0.0
        %v1232 = vadd.f32 %v1230, %v1231
        %v1233 = vsel %vm1089, %v921, 0.0
        %v1234 = vadd.f32 %v1232, %v1233
        %v1235 = vsel %vm1089, %v924, 0.0
        %v1236 = vadd.f32 %v1234, %v1235
        %v1237 = vsel %vm1089, %v927, 0.0
        %v1238 = vadd.f32 %v1236, %v1237
        %v1239 = vsel %vm1089, %v930, 0.0
        %v1240 = vadd.f32 %v1238, %v1239
        %v1241 = vsel %vm1089, %v933, 0.0
        %v1242 = vadd.f32 %v1240, %v1241
        %v1243 = vsel %vm1089, %v936, 0.0
        %v1244 = vadd.f32 %v1242, %v1243
        %v1245 = vsel %vm1089, %v939, 0.0
        %v1246 = vadd.f32 %v1244, %v1245
        %v1247 = vsel %vm1089, %v942, 0.0
        %v1248 = vadd.f32 %v1246, %v1247
        %v1249 = vsel %vm1089, %v945, 0.0
        %v1250 = vadd.f32 %v1248, %v1249
        %v1251 = vsel %vm1089, %v948, 0.0
        %v1252 = vadd.f32 %v1250, %v1251
        %v1253 = vsel %vm1089, %v951, 0.0
        %v1254 = vadd.f32 %v1252, %v1253
        %v1255 = vsel %vm1089, %v954, 0.0
        %v1256 = vadd.f32 %v1254, %v1255
        %v1257 = vsel %vm1089, %v957, 0.0
        %v1258 = vadd.f32 %v1256, %v1257
        %v1259 = vsel %vm1089, %v960, 0.0
        %v1260 = vadd.f32 %v1258, %v1259
        %v1261 = vsel %vm1089, %v963, 0.0
        %v1262 = vadd.f32 %v1260, %v1261
        %v1263 = vsel %vm1089, %v966, 0.0
        %v1264 = vadd.f32 %v1262, %v1263
        %v1265 = vsel %vm1089, %v969, 0.0
        %v1266 = vadd.f32 %v1264, %v1265
        %v1267 = vsel %vm1089, %v972, 0.0
        %v1268 = vadd.f32 %v1266, %v1267
        %v1269 = vsel %vm1089, %v975, 0.0
        %v1270 = vadd.f32 %v1268, %v1269
        %v1271 = vsel %vm1089, %v978, 0.0
        %v1272 = vadd.f32 %v1270, %v1271
        %v1273 = vsel %vm1089, %v981, 0.0
        %v1274 = vadd.f32 %v1272, %v1273
        %v1275 = vsel %vm1089, %v984, 0.0
        %v1276 = vadd.f32 %v1274, %v1275
        %v1277 = vsel %vm1089, %v987, 0.0
        %v1278 = vadd.f32 %v1276, %v1277
        %v1279 = vsel %vm1089, %v990, 0.0
        %v1280 = vadd.f32 %v1278, %v1279
        %v1281 = vsel %vm1089, %v993, 0.0
        %v1282 = vadd.f32 %v1280, %v1281
        %v1283 = vsel %vm1089, %v996, 0.0
        %v1284 = vadd.f32 %v1282, %v1283
        %v1285 = vsel %vm1089, %v999, 0.0
        %v1286 = vadd.f32 %v1284, %v1285
        %v1287 = vsel %vm1089, %v1002, 0.0
        %v1288 = vadd.f32 %v1286, %v1287
        %v1289 = vsel %vm1089, %v1005, 0.0
        %v1290 = vadd.f32 %v1288, %v1289
        %v1291 = vsel %vm1089, %v1008, 0.0
        %v1292 = vadd.f32 %v1290, %v1291
        %v1293 = vsel %vm1089, %v1011, 0.0
        %v1294 = vadd.f32 %v1292, %v1293
        %v1295 = vsel %vm1089, %v1014, 0.0
        %v1296 = vadd.f32 %v1294, %v1295
        %v1297 = vsel %vm1089, %v1017, 0.0
        %v1298 = vadd.f32 %v1296, %v1297
        %v1299 = vsel %vm1089, %v1020, 0.0
        %v1300 = vadd.f32 %v1298, %v1299
        %v1301 = vsel %vm1089, %v1023, 0.0
        %v1302 = vadd.f32 %v1300, %v1301
        %v1303 = vsel %vm1089, %v1026, 0.0
        %v1304 = vadd.f32 %v1302, %v1303
        %v1305 = vsel %vm1089, %v1029, 0.0
        %v1306 = vadd.f32 %v1304, %v1305
        %v1307 = vsel %vm1089, %v1032, 0.0
        %v1308 = vadd.f32 %v1306, %v1307
        %v1309 = vsel %vm1089, %v1035, 0.0
        %v1310 = vadd.f32 %v1308, %v1309
        %v1311 = vsel %vm1089, %v1038, 0.0
        %v1312 = vadd.f32 %v1310, %v1311
        %v1313 = vsel %vm1089, %v1041, 0.0
        %v1314 = vadd.f32 %v1312, %v1313
        %v1315 = vsel %vm1089, %v1044, 0.0
        %v1316 = vadd.f32 %v1314, %v1315
        %v1317 = vsel %vm1089, %v1047, 0.0
        %v1318 = vadd.f32 %v1316, %v1317
        %v1319 = vsel %vm1089, %v1050, 0.0
        %v1320 = vadd.f32 %v1318, %v1319
        %v1321 = vsel %vm1089, %v1053, 0.0
        %v1322 = vadd.f32 %v1320, %v1321
        %v1323 = vsel %vm1089, %v1056, 0.0
        %v1324 = vadd.f32 %v1322, %v1323
        %v1325 = vsel %vm1089, %v1059, 0.0
        %v1326 = vadd.f32 %v1324, %v1325
        %v1327 = vsel %vm1089, %v1062, 0.0
        %v1328 = vadd.f32 %v1326, %v1327
        %v1329 = vsel %vm1089, %v1065, 0.0
        %v1330 = vadd.f32 %v1328, %v1329
        %v1331 = vsel %vm1089, %v1068, 0.0
        %v1332 = vadd.f32 %v1330, %v1331
        %v1333 = vsel %vm1089, %v1071, 0.0
        %v1334 = vadd.f32 %v1332, %v1333
        %v1335 = vsel %vm1089, %v1074, 0.0
        %v1336 = vadd.f32 %v1334, %v1335
        %v1337 = vsel %vm1089, %v1077, 0.0
        %v1338 = vadd.f32 %v1336, %v1337
        %v1339 = vsel %vm1089, %v1080, 0.0
        %v1340 = vadd.f32 %v1338, %v1339
        %v1341 = vsel %vm1089, %v1083, 0.0
        %v1342 = vadd.f32 %v1340, %v1341
        %v1343 = vsel %vm1089, %v1086, 0.0
        %v1344 = vadd.f32 %v1342, %v1343
        %v1345 = vrot.slane %v1344, 4
        %v1346 = vadd.f32 %v1344, %v1345
        %v1347 = vrot.slane %v1346, 2
        %v1348 = vadd.f32 %v1346, %v1347
        %v1349 = vrot.slane %v1348, 1
        %v1350 = vadd.f32 %v1348, %v1349
        %v1351 = vadd.f32 %v1088, %v1350
        %vm1352 = vcmask 253952
        %1353 = vst.msk [vmem:[#allocation2] sm:$0x1] %vm1352, %v1351
        %v1354 = vld [vmem:[#allocation4] sm:$0x1]
        %v1355 = vmul.f32 %v705, %v705
        %v1356 = vmul.f32 %v708, %v708
        %v1357 = vmul.f32 %v711, %v711
        %v1358 = vmul.f32 %v714, %v714
        %v1359 = vmul.f32 %v717, %v717
        %v1360 = vmul.f32 %v720, %v720
        %v1361 = vmul.f32 %v723, %v723
        %v1362 = vmul.f32 %v726, %v726
        %v1363 = vmul.f32 %v729, %v729
        %v1364 = vmul.f32 %v732, %v732
        %v1365 = vmul.f32 %v735, %v735
        %v1366 = vmul.f32 %v738, %v738
        %v1367 = vmul.f32 %v741, %v741
        %v1368 = vmul.f32 %v744, %v744
        %v1369 = vmul.f32 %v747, %v747
        %v1370 = vmul.f32 %v750, %v750
        %v1371 = vmul.f32 %v753, %v753
        %v1372 = vmul.f32 %v756, %v756
        %v1373 = vmul.f32 %v759, %v759
        %v1374 = vmul.f32 %v762, %v762
        %v1375 = vmul.f32 %v765, %v765
        %v1376 = vmul.f32 %v768, %v768
        %v1377 = vmul.f32 %v771, %v771
        %v1378 = vmul.f32 %v774, %v774
        %v1379 = vmul.f32 %v777, %v777
        %v1380 = vmul.f32 %v780, %v780
        %v1381 = vmul.f32 %v783, %v783
        %v1382 = vmul.f32 %v786, %v786
        %v1383 = vmul.f32 %v789, %v789
        %v1384 = vmul.f32 %v792, %v792
        %v1385 = vmul.f32 %v795, %v795
        %v1386 = vmul.f32 %v798, %v798
        %v1387 = vmul.f32 %v801, %v801
        %v1388 = vmul.f32 %v804, %v804
        %v1389 = vmul.f32 %v807, %v807
        %v1390 = vmul.f32 %v810, %v810
        %v1391 = vmul.f32 %v813, %v813
        %v1392 = vmul.f32 %v816, %v816
        %v1393 = vmul.f32 %v819, %v819
        %v1394 = vmul.f32 %v822, %v822
        %v1395 = vmul.f32 %v825, %v825
        %v1396 = vmul.f32 %v828, %v828
        %v1397 = vmul.f32 %v831, %v831
        %v1398 = vmul.f32 %v834, %v834
        %v1399 = vmul.f32 %v837, %v837
        %v1400 = vmul.f32 %v840, %v840
        %v1401 = vmul.f32 %v843, %v843
        %v1402 = vmul.f32 %v846, %v846
        %v1403 = vmul.f32 %v849, %v849
        %v1404 = vmul.f32 %v852, %v852
        %v1405 = vmul.f32 %v855, %v855
        %v1406 = vmul.f32 %v858, %v858
        %v1407 = vmul.f32 %v861, %v861
        %v1408 = vmul.f32 %v864, %v864
        %v1409 = vmul.f32 %v867, %v867
        %v1410 = vmul.f32 %v870, %v870
        %v1411 = vmul.f32 %v873, %v873
        %v1412 = vmul.f32 %v876, %v876
        %v1413 = vmul.f32 %v879, %v879
        %v1414 = vmul.f32 %v882, %v882
        %v1415 = vmul.f32 %v885, %v885
        %v1416 = vmul.f32 %v888, %v888
        %v1417 = vmul.f32 %v891, %v891
        %v1418 = vmul.f32 %v894, %v894
        %v1419 = vmul.f32 %v897, %v897
        %v1420 = vmul.f32 %v900, %v900
        %v1421 = vmul.f32 %v903, %v903
        %v1422 = vmul.f32 %v906, %v906
        %v1423 = vmul.f32 %v909, %v909
        %v1424 = vmul.f32 %v912, %v912
        %v1425 = vmul.f32 %v915, %v915
        %v1426 = vmul.f32 %v918, %v918
        %v1427 = vmul.f32 %v921, %v921
        %v1428 = vmul.f32 %v924, %v924
        %v1429 = vmul.f32 %v927, %v927
        %v1430 = vmul.f32 %v930, %v930
        %v1431 = vmul.f32 %v933, %v933
        %v1432 = vmul.f32 %v936, %v936
        %v1433 = vmul.f32 %v939, %v939
        %v1434 = vmul.f32 %v942, %v942
        %v1435 = vmul.f32 %v945, %v945
        %v1436 = vmul.f32 %v948, %v948
        %v1437 = vmul.f32 %v951, %v951
        %v1438 = vmul.f32 %v954, %v954
        %v1439 = vmul.f32 %v957, %v957
        %v1440 = vmul.f32 %v960, %v960
        %v1441 = vmul.f32 %v963, %v963
        %v1442 = vmul.f32 %v966, %v966
        %v1443 = vmul.f32 %v969, %v969
        %v1444 = vmul.f32 %v972, %v972
        %v1445 = vmul.f32 %v975, %v975
        %v1446 = vmul.f32 %v978, %v978
        %v1447 = vmul.f32 %v981, %v981
        %v1448 = vmul.f32 %v984, %v984
        %v1449 = vmul.f32 %v987, %v987
        %v1450 = vmul.f32 %v990, %v990
        %v1451 = vmul.f32 %v993, %v993
        %v1452 = vmul.f32 %v996, %v996
        %v1453 = vmul.f32 %v999, %v999
        %v1454 = vmul.f32 %v1002, %v1002
        %v1455 = vmul.f32 %v1005, %v1005
        %v1456 = vmul.f32 %v1008, %v1008
        %v1457 = vmul.f32 %v1011, %v1011
        %v1458 = vmul.f32 %v1014, %v1014
        %v1459 = vmul.f32 %v1017, %v1017
        %v1460 = vmul.f32 %v1020, %v1020
        %v1461 = vmul.f32 %v1023, %v1023
        %v1462 = vmul.f32 %v1026, %v1026
        %v1463 = vmul.f32 %v1029, %v1029
        %v1464 = vmul.f32 %v1032, %v1032
        %v1465 = vmul.f32 %v1035, %v1035
        %v1466 = vmul.f32 %v1038, %v1038
        %v1467 = vmul.f32 %v1041, %v1041
        %v1468 = vmul.f32 %v1044, %v1044
        %v1469 = vmul.f32 %v1047, %v1047
        %v1470 = vmul.f32 %v1050, %v1050
        %v1471 = vmul.f32 %v1053, %v1053
        %v1472 = vmul.f32 %v1056, %v1056
        %v1473 = vmul.f32 %v1059, %v1059
        %v1474 = vmul.f32 %v1062, %v1062
        %v1475 = vmul.f32 %v1065, %v1065
        %v1476 = vmul.f32 %v1068, %v1068
        %v1477 = vmul.f32 %v1071, %v1071
        %v1478 = vmul.f32 %v1074, %v1074
        %v1479 = vmul.f32 %v1077, %v1077
        %v1480 = vmul.f32 %v1080, %v1080
        %v1481 = vmul.f32 %v1083, %v1083
        %v1482 = vmul.f32 %v1086, %v1086
        %v1483 = vsel %vm1089, %v1355, 0.0
        %v1484 = vsel %vm1089, %v1356, 0.0
        %v1485 = vadd.f32 %v1483, %v1484
        %v1486 = vsel %vm1089, %v1357, 0.0
        %v1487 = vadd.f32 %v1485, %v1486
        %v1488 = vsel %vm1089, %v1358, 0.0
        %v1489 = vadd.f32 %v1487, %v1488
        %v1490 = vsel %vm1089, %v1359, 0.0
        %v1491 = vadd.f32 %v1489, %v1490
        %v1492 = vsel %vm1089, %v1360, 0.0
        %v1493 = vadd.f32 %v1491, %v1492
        %v1494 = vsel %vm1089, %v1361, 0.0
        %v1495 = vadd.f32 %v1493, %v1494
        %v1496 = vsel %vm1089, %v1362, 0.0
        %v1497 = vadd.f32 %v1495, %v1496
        %v1498 = vsel %vm1089, %v1363, 0.0
        %v1499 = vadd.f32 %v1497, %v1498
        %v1500 = vsel %vm1089, %v1364, 0.0
        %v1501 = vadd.f32 %v1499, %v1500
        %v1502 = vsel %vm1089, %v1365, 0.0
        %v1503 = vadd.f32 %v1501, %v1502
        %v1504 = vsel %vm1089, %v1366, 0.0
        %v1505 = vadd.f32 %v1503, %v1504
        %v1506 = vsel %vm1089, %v1367, 0.0
        %v1507 = vadd.f32 %v1505, %v1506
        %v1508 = vsel %vm1089, %v1368, 0.0
        %v1509 = vadd.f32 %v1507, %v1508
        %v1510 = vsel %vm1089, %v1369, 0.0
        %v1511 = vadd.f32 %v1509, %v1510
        %v1512 = vsel %vm1089, %v1370, 0.0
        %v1513 = vadd.f32 %v1511, %v1512
        %v1514 = vsel %vm1089, %v1371, 0.0
        %v1515 = vadd.f32 %v1513, %v1514
        %v1516 = vsel %vm1089, %v1372, 0.0
        %v1517 = vadd.f32 %v1515, %v1516
        %v1518 = vsel %vm1089, %v1373, 0.0
        %v1519 = vadd.f32 %v1517, %v1518
        %v1520 = vsel %vm1089, %v1374, 0.0
        %v1521 = vadd.f32 %v1519, %v1520
        %v1522 = vsel %vm1089, %v1375, 0.0
        %v1523 = vadd.f32 %v1521, %v1522
        %v1524 = vsel %vm1089, %v1376, 0.0
        %v1525 = vadd.f32 %v1523, %v1524
        %v1526 = vsel %vm1089, %v1377, 0.0
        %v1527 = vadd.f32 %v1525, %v1526
        %v1528 = vsel %vm1089, %v1378, 0.0
        %v1529 = vadd.f32 %v1527, %v1528
        %v1530 = vsel %vm1089, %v1379, 0.0
        %v1531 = vadd.f32 %v1529, %v1530
        %v1532 = vsel %vm1089, %v1380, 0.0
        %v1533 = vadd.f32 %v1531, %v1532
        %v1534 = vsel %vm1089, %v1381, 0.0
        %v1535 = vadd.f32 %v1533, %v1534
        %v1536 = vsel %vm1089, %v1382, 0.0
        %v1537 = vadd.f32 %v1535, %v1536
        %v1538 = vsel %vm1089, %v1383, 0.0
        %v1539 = vadd.f32 %v1537, %v1538
        %v1540 = vsel %vm1089, %v1384, 0.0
        %v1541 = vadd.f32 %v1539, %v1540
        %v1542 = vsel %vm1089, %v1385, 0.0
        %v1543 = vadd.f32 %v1541, %v1542
        %v1544 = vsel %vm1089, %v1386, 0.0
        %v1545 = vadd.f32 %v1543, %v1544
        %v1546 = vsel %vm1089, %v1387, 0.0
        %v1547 = vadd.f32 %v1545, %v1546
        %v1548 = vsel %vm1089, %v1388, 0.0
        %v1549 = vadd.f32 %v1547, %v1548
        %v1550 = vsel %vm1089, %v1389, 0.0
        %v1551 = vadd.f32 %v1549, %v1550
        %v1552 = vsel %vm1089, %v1390, 0.0
        %v1553 = vadd.f32 %v1551, %v1552
        %v1554 = vsel %vm1089, %v1391, 0.0
        %v1555 = vadd.f32 %v1553, %v1554
        %v1556 = vsel %vm1089, %v1392, 0.0
        %v1557 = vadd.f32 %v1555, %v1556
        %v1558 = vsel %vm1089, %v1393, 0.0
        %v1559 = vadd.f32 %v1557, %v1558
        %v1560 = vsel %vm1089, %v1394, 0.0
        %v1561 = vadd.f32 %v1559, %v1560
        %v1562 = vsel %vm1089, %v1395, 0.0
        %v1563 = vadd.f32 %v1561, %v1562
        %v1564 = vsel %vm1089, %v1396, 0.0
        %v1565 = vadd.f32 %v1563, %v1564
        %v1566 = vsel %vm1089, %v1397, 0.0
        %v1567 = vadd.f32 %v1565, %v1566
        %v1568 = vsel %vm1089, %v1398, 0.0
        %v1569 = vadd.f32 %v1567, %v1568
        %v1570 = vsel %vm1089, %v1399, 0.0
        %v1571 = vadd.f32 %v1569, %v1570
        %v1572 = vsel %vm1089, %v1400, 0.0
        %v1573 = vadd.f32 %v1571, %v1572
        %v1574 = vsel %vm1089, %v1401, 0.0
        %v1575 = vadd.f32 %v1573, %v1574
        %v1576 = vsel %vm1089, %v1402, 0.0
        %v1577 = vadd.f32 %v1575, %v1576
        %v1578 = vsel %vm1089, %v1403, 0.0
        %v1579 = vadd.f32 %v1577, %v1578
        %v1580 = vsel %vm1089, %v1404, 0.0
        %v1581 = vadd.f32 %v1579, %v1580
        %v1582 = vsel %vm1089, %v1405, 0.0
        %v1583 = vadd.f32 %v1581, %v1582
        %v1584 = vsel %vm1089, %v1406, 0.0
        %v1585 = vadd.f32 %v1583, %v1584
        %v1586 = vsel %vm1089, %v1407, 0.0
        %v1587 = vadd.f32 %v1585, %v1586
        %v1588 = vsel %vm1089, %v1408, 0.0
        %v1589 = vadd.f32 %v1587, %v1588
        %v1590 = vsel %vm1089, %v1409, 0.0
        %v1591 = vadd.f32 %v1589, %v1590
        %v1592 = vsel %vm1089, %v1410, 0.0
        %v1593 = vadd.f32 %v1591, %v1592
        %v1594 = vsel %vm1089, %v1411, 0.0
        %v1595 = vadd.f32 %v1593, %v1594
        %v1596 = vsel %vm1089, %v1412, 0.0
        %v1597 = vadd.f32 %v1595, %v1596
        %v1598 = vsel %vm1089, %v1413, 0.0
        %v1599 = vadd.f32 %v1597, %v1598
        %v1600 = vsel %vm1089, %v1414, 0.0
        %v1601 = vadd.f32 %v1599, %v1600
        %v1602 = vsel %vm1089, %v1415, 0.0
        %v1603 = vadd.f32 %v1601, %v1602
        %v1604 = vsel %vm1089, %v1416, 0.0
        %v1605 = vadd.f32 %v1603, %v1604
        %v1606 = vsel %vm1089, %v1417, 0.0
        %v1607 = vadd.f32 %v1605, %v1606
        %v1608 = vsel %vm1089, %v1418, 0.0
        %v1609 = vadd.f32 %v1607, %v1608
        %v1610 = vsel %vm1089, %v1419, 0.0
        %v1611 = vadd.f32 %v1609, %v1610
        %v1612 = vsel %vm1089, %v1420, 0.0
        %v1613 = vadd.f32 %v1611, %v1612
        %v1614 = vsel %vm1089, %v1421, 0.0
        %v1615 = vadd.f32 %v1613, %v1614
        %v1616 = vsel %vm1089, %v1422, 0.0
        %v1617 = vadd.f32 %v1615, %v1616
        %v1618 = vsel %vm1089, %v1423, 0.0
        %v1619 = vadd.f32 %v1617, %v1618
        %v1620 = vsel %vm1089, %v1424, 0.0
        %v1621 = vadd.f32 %v1619, %v1620
        %v1622 = vsel %vm1089, %v1425, 0.0
        %v1623 = vadd.f32 %v1621, %v1622
        %v1624 = vsel %vm1089, %v1426, 0.0
        %v1625 = vadd.f32 %v1623, %v1624
        %v1626 = vsel %vm1089, %v1427, 0.0
        %v1627 = vadd.f32 %v1625, %v1626
        %v1628 = vsel %vm1089, %v1428, 0.0
        %v1629 = vadd.f32 %v1627, %v1628
        %v1630 = vsel %vm1089, %v1429, 0.0
        %v1631 = vadd.f32 %v1629, %v1630
        %v1632 = vsel %vm1089, %v1430, 0.0
        %v1633 = vadd.f32 %v1631, %v1632
        %v1634 = vsel %vm1089, %v1431, 0.0
        %v1635 = vadd.f32 %v1633, %v1634
        %v1636 = vsel %vm1089, %v1432, 0.0
        %v1637 = vadd.f32 %v1635, %v1636
        %v1638 = vsel %vm1089, %v1433, 0.0
        %v1639 = vadd.f32 %v1637, %v1638
        %v1640 = vsel %vm1089, %v1434, 0.0
        %v1641 = vadd.f32 %v1639, %v1640
        %v1642 = vsel %vm1089, %v1435, 0.0
        %v1643 = vadd.f32 %v1641, %v1642
        %v1644 = vsel %vm1089, %v1436, 0.0
        %v1645 = vadd.f32 %v1643, %v1644
        %v1646 = vsel %vm1089, %v1437, 0.0
        %v1647 = vadd.f32 %v1645, %v1646
        %v1648 = vsel %vm1089, %v1438, 0.0
        %v1649 = vadd.f32 %v1647, %v1648
        %v1650 = vsel %vm1089, %v1439, 0.0
        %v1651 = vadd.f32 %v1649, %v1650
        %v1652 = vsel %vm1089, %v1440, 0.0
        %v1653 = vadd.f32 %v1651, %v1652
        %v1654 = vsel %vm1089, %v1441, 0.0
        %v1655 = vadd.f32 %v1653, %v1654
        %v1656 = vsel %vm1089, %v1442, 0.0
        %v1657 = vadd.f32 %v1655, %v1656
        %v1658 = vsel %vm1089, %v1443, 0.0
        %v1659 = vadd.f32 %v1657, %v1658
        %v1660 = vsel %vm1089, %v1444, 0.0
        %v1661 = vadd.f32 %v1659, %v1660
        %v1662 = vsel %vm1089, %v1445, 0.0
        %v1663 = vadd.f32 %v1661, %v1662
        %v1664 = vsel %vm1089, %v1446, 0.0
        %v1665 = vadd.f32 %v1663, %v1664
        %v1666 = vsel %vm1089, %v1447, 0.0
        %v1667 = vadd.f32 %v1665, %v1666
        %v1668 = vsel %vm1089, %v1448, 0.0
        %v1669 = vadd.f32 %v1667, %v1668
        %v1670 = vsel %vm1089, %v1449, 0.0
        %v1671 = vadd.f32 %v1669, %v1670
        %v1672 = vsel %vm1089, %v1450, 0.0
        %v1673 = vadd.f32 %v1671, %v1672
        %v1674 = vsel %vm1089, %v1451, 0.0
        %v1675 = vadd.f32 %v1673, %v1674
        %v1676 = vsel %vm1089, %v1452, 0.0
        %v1677 = vadd.f32 %v1675, %v1676
        %v1678 = vsel %vm1089, %v1453, 0.0
        %v1679 = vadd.f32 %v1677, %v1678
        %v1680 = vsel %vm1089, %v1454, 0.0
        %v1681 = vadd.f32 %v1679, %v1680
        %v1682 = vsel %vm1089, %v1455, 0.0
        %v1683 = vadd.f32 %v1681, %v1682
        %v1684 = vsel %vm1089, %v1456, 0.0
        %v1685 = vadd.f32 %v1683, %v1684
        %v1686 = vsel %vm1089, %v1457, 0.0
        %v1687 = vadd.f32 %v1685, %v1686
        %v1688 = vsel %vm1089, %v1458, 0.0
        %v1689 = vadd.f32 %v1687, %v1688
        %v1690 = vsel %vm1089, %v1459, 0.0
        %v1691 = vadd.f32 %v1689, %v1690
        %v1692 = vsel %vm1089, %v1460, 0.0
        %v1693 = vadd.f32 %v1691, %v1692
        %v1694 = vsel %vm1089, %v1461, 0.0
        %v1695 = vadd.f32 %v1693, %v1694
        %v1696 = vsel %vm1089, %v1462, 0.0
        %v1697 = vadd.f32 %v1695, %v1696
        %v1698 = vsel %vm1089, %v1463, 0.0
        %v1699 = vadd.f32 %v1697, %v1698
        %v1700 = vsel %vm1089, %v1464, 0.0
        %v1701 = vadd.f32 %v1699, %v1700
        %v1702 = vsel %vm1089, %v1465, 0.0
        %v1703 = vadd.f32 %v1701, %v1702
        %v1704 = vsel %vm1089, %v1466, 0.0
        %v1705 = vadd.f32 %v1703, %v1704
        %v1706 = vsel %vm1089, %v1467, 0.0
        %v1707 = vadd.f32 %v1705, %v1706
        %v1708 = vsel %vm1089, %v1468, 0.0
        %v1709 = vadd.f32 %v1707, %v1708
        %v1710 = vsel %vm1089, %v1469, 0.0
        %v1711 = vadd.f32 %v1709, %v1710
        %v1712 = vsel %vm1089, %v1470, 0.0
        %v1713 = vadd.f32 %v1711, %v1712
        %v1714 = vsel %vm1089, %v1471, 0.0
        %v1715 = vadd.f32 %v1713, %v1714
        %v1716 = vsel %vm1089, %v1472, 0.0
        %v1717 = vadd.f32 %v1715, %v1716
        %v1718 = vsel %vm1089, %v1473, 0.0
        %v1719 = vadd.f32 %v1717, %v1718
        %v1720 = vsel %vm1089, %v1474, 0.0
        %v1721 = vadd.f32 %v1719, %v1720
        %v1722 = vsel %vm1089, %v1475, 0.0
        %v1723 = vadd.f32 %v1721, %v1722
        %v1724 = vsel %vm1089, %v1476, 0.0
        %v1725 = vadd.f32 %v1723, %v1724
        %v1726 = vsel %vm1089, %v1477, 0.0
        %v1727 = vadd.f32 %v1725, %v1726
        %v1728 = vsel %vm1089, %v1478, 0.0
        %v1729 = vadd.f32 %v1727, %v1728
        %v1730 = vsel %vm1089, %v1479, 0.0
        %v1731 = vadd.f32 %v1729, %v1730
        %v1732 = vsel %vm1089, %v1480, 0.0
        %v1733 = vadd.f32 %v1731, %v1732
        %v1734 = vsel %vm1089, %v1481, 0.0
        %v1735 = vadd.f32 %v1733, %v1734
        %v1736 = vsel %vm1089, %v1482, 0.0
        %v1737 = vadd.f32 %v1735, %v1736
        %v1738 = vrot.slane %v1737, 4
        %v1739 = vadd.f32 %v1737, %v1738
        %v1740 = vrot.slane %v1739, 2
        %v1741 = vadd.f32 %v1739, %v1740
        %v1742 = vrot.slane %v1741, 1
        %v1743 = vadd.f32 %v1741, %v1742
        %v1744 = vadd.f32 %v1354, %v1743
        %1745 = vst.msk [vmem:[#allocation4] sm:$0x1] %vm1352, %v1744
        // Predicated region
        $region33: #{tpu_custom_call.1} parent=27 // pred_check
          %p1746 = pneg %p77
        $region34: #{tpu_custom_call.1} parent=27 // pred_check_branch
          %1748 = sbr.rel (%p1746) target = $region36
        $region35: #{tpu_custom_call.1} parent=27 // pred_region
          %1750 = vsyncadd [#allocation3], 0
          %s1752 = sshll.u32 [#allocation2], 4
          %s1753 = int_to_ptr.vmem [resolvable:$true] %s1752
          %s1754 = sshll.u32 %s2, 4
          %s1755 = int_to_ptr.hbm [resolvable:$true] %s1754
          %1757 = dma.vmem_to_hbm [thread:$0]  %s1753, 16, %s1755, [#allocation3]
        $region36: #{tpu_custom_call.1} parent=27 // pred_fallthru
          _
        // Predicated region
        $region37: #{tpu_custom_call.1} parent=27 // pred_check
          %p1758 = pneg %p98
        $region38: #{tpu_custom_call.1} parent=27 // pred_check_branch
          %1760 = sbr.rel (%p1758) target = $region40
        $region39: #{tpu_custom_call.1} parent=27 // pred_region
          %1762 = vsyncadd [#allocation5], 0
          %s1764 = sshll.u32 [#allocation4], 4
          %s1765 = int_to_ptr.vmem [resolvable:$true] %s1764
          %s1766 = sshll.u32 %s3, 4
          %s1767 = int_to_ptr.hbm [resolvable:$true] %s1766
          %1769 = dma.vmem_to_hbm [thread:$0]  %s1765, 16, %s1767, [#allocation5]
        $region40: #{tpu_custom_call.1} parent=27 // pred_fallthru
          _
        // Predicated region
        $region41: #{tpu_custom_call.1} parent=27 // pred_check
          %p1770 = pneg %p77
        $region42: #{tpu_custom_call.1} parent=27 // pred_check_branch
          %1772 = sbr.rel (%p1770) target = $region44
        $region43: #{tpu_custom_call.1} parent=27 // pred_region
          %1774 = dma.done [#allocation3], 16
        $region44: #{tpu_custom_call.1} parent=27 // pred_fallthru
          _
        // Predicated region
        $region45: #{tpu_custom_call.1} parent=27 // pred_check
          %p1775 = pneg %p98
        $region46: #{tpu_custom_call.1} parent=27 // pred_check_branch
          %1777 = sbr.rel (%p1775) target = $region48
        $region47: #{tpu_custom_call.1} parent=27 // pred_region
          %1779 = dma.done [#allocation5], 16
        $region48: #{tpu_custom_call.1} parent=27 // pred_fallthru
          _
      $region28: #{tpu_custom_call.1} parent=5 // pred_fallthru
        _
      %p1780 = scmp.le.s32.totalorder 2, %s12
      // Predicated region
      $region49: #{tpu_custom_call.1} parent=5 // pred_check
        %p1781 = pneg %p1780
      $region50: #{tpu_custom_call.1} parent=5 // pred_check_branch
        %1783 = sbr.rel (%p1781) target = $region52
      $region51: #{tpu_custom_call.1} parent=5 // pred_region
        %s1784 = ssub.s32 %s12, 2
      $region52: #{tpu_custom_call.1} parent=5 // pred_fallthru
        _
    $region6: #{tpu_custom_call.1} parent=1 // loop_footer
      %s16 = sadd.s32 1, %s12
    $region7: #{tpu_custom_call.1} parent=1 // loop_footer_branch
      %11 = sbr.rel target = $region3
    $region8: #{tpu_custom_call.1} parent=1 // loop_exit
      _
    %1785 = vsyncpa [#allocation3], 1
    %s1786 = scalar_lea.sflag [#allocation3], 1
    %1787 = vsyncpa %s1786, 1
    %1788 = vsyncpa [#allocation5], 1

</llo_original>
